<compile_context>
chip_gen: v7x
topology: tpu7x:2x2x1
jax: 0.10.0
libtpu: 0.0.40
codegen_flags: <defaults>
</compile_context>

<pallas_src>
import math
import functools

import jax
import jax.numpy as jnp
from jax.experimental import pallas as pl
from jax.experimental.pallas import tpu as pltpu  # noqa: F401  (TPU backend)

# ----------------------------- Detect config --------------------------------
NC = 3                                   # number of classes (small, synthetic)
ANCHORS = ((10.0, 13.0, 16.0, 30.0, 33.0, 23.0),
           (30.0, 61.0, 62.0, 45.0, 59.0, 119.0),
           (116.0, 90.0, 156.0, 198.0, 373.0, 326.0))
NL = len(ANCHORS)                        # number of detection layers
NA = len(ANCHORS[0]) // 2                # anchors per layer
NO = NC + 5                              # outputs per anchor (== 8)
CH = (16, 32, 64)                        # in-channels of the 3 feature levels
STRIDES = (8.0, 16.0, 32.0)              # image size 128 / (16, 8, 4)

# anchors as compile-time (w, h) pairs per level / per anchor (pixels)
ANCH_PAIRS = tuple(tuple((ANCHORS[l][2 * a], ANCHORS[l][2 * a + 1])
                         for a in range(NA)) for l in range(NL))
ANCH_PIX = jnp.asarray(ANCHORS, dtype=jnp.float32).reshape(NL, NA, 2)


# ----------------------- fused Detect-head Pallas kernel --------------------
def _detect_head_kernel(x_ref, w_ref, b_ref,
                        p0_ref, p1_ref, p2_ref, z_ref,
                        *, spatial, strides, anchors, bsz):
    p_refs = (p0_ref, p1_ref, p2_ref)
    hws = tuple(ny * nx for ny, nx in spatial)

    # ---- ONE block-diagonal 1x1-conv matmul for all levels & all batches ----
    # w: (NA*NO, sum(CH)), x: (sum(CH), B*sum(HW)) block-diag  ->  (NA*NO, B*sum(HW))
    p_all = jnp.dot(w_ref[...], x_ref[...], preferred_element_type=jnp.float32)
    b_all = b_ref[...]                                 # (NA*NO, NL)

    col_base = 0                                       # lane offset into p_all
    z_base = 0                                         # lane offset into z
    for lvl in range(NL):
        ny, nx = spatial[lvl]
        hw = hws[lvl]
        stride = float(strides[lvl])

        # per-level lane grid (exact integer iota) and per-row output index,
        # hoisted out of the (anchor, batch) loops; shapes are (1|NO, hw) only.
        pos = jax.lax.broadcasted_iota(jnp.int32, (1, hw), 1)
        if (nx & (nx - 1)) == 0:                       # power of two: shift/mask
            gy = (pos >> (int(nx).bit_length() - 1)).astype(jnp.float32)
            gx = (pos & (nx - 1)).astype(jnp.float32)
        else:
            gy_i = pos // nx
            gx = (pos - gy_i * nx).astype(jnp.float32)
            gy = gy_i.astype(jnp.float32)
        o_idx = jax.lax.broadcasted_iota(jnp.int32, (NO, hw), 0)
        grid_v = jnp.where(o_idx == 0, gx, gy)         # (NO, hw)

        for a in range(NA):
            r0 = a * NO
            bias = b_all[r0:r0 + NO, lvl:lvl + 1]      # (NO, 1)
            anc_w, anc_h = anchors[lvl][a]
            anc_v = jnp.where(o_idx == 2, anc_w, anc_h)  # (NO, hw) per-anchor consts

            for b in range(bsz):
                c0 = col_base + b * hw
                pa = p_all[r0:r0 + NO, c0:c0 + hw] + bias          # (NO, hw)
                p_refs[lvl][b, a, :, :] = pa                       # lane-dense store

                # ---- decode (sigmoid / grid / anchors), (8, hw) tiles ----
                y = jax.nn.sigmoid(pa)
                xy = (y * 2.0 - 0.5 + grid_v) * stride
                wh = (y * 2.0) ** 2 * anc_v
                dec = jnp.where(o_idx < 2, xy, jnp.where(o_idx < 4, wh, y))

                lo = z_base + a * hw
                z_ref[b, :, lo:lo + hw] = dec                      # lane-dense store

        col_base += bsz * hw
        z_base += NA * hw


# --------------------------- Detect forward (inference) ----------------------
def detect_forward(xs, ws, bs):
    """xs[i]: NCHW feature map.  Returns (cat(z, 1), [x0, x1, x2]) like Detect."""
    bsz = int(xs[0].shape[0])
    spatial = tuple((int(x.shape[2]), int(x.shape[3])) for x in xs)
    hws = tuple(ny * nx for ny, nx in spatial)
    total = NA * sum(hws)
    ksum = sum(CH)

    # ---- block-diagonal input assembly (wrapper-side layout plumbing) ----
    # rows = channels (levels concatenated), cols = per-level [b0 HW, b1 HW, ...]
    x_bd = jnp.zeros((ksum, bsz * sum(hws)), jnp.float32)
    r, c = 0, 0
    for l, x in enumerate(xs):
        cch, hw = CH[l], hws[l]
        xf = x.reshape(bsz, cch, hw).transpose(1, 0, 2).reshape(cch, bsz * hw)
        x_bd = x_bd.at[r:r + cch, c:c + bsz * hw].set(xf)
        r += cch
        c += bsz * hw

    w_cat = jnp.concatenate(ws, axis=1)                 # (NA*NO, sum(CH))
    b_cat = jnp.concatenate(bs, axis=1)                 # (NA*NO, NL)

    kernel = functools.partial(_detect_head_kernel, spatial=spatial,
                               strides=STRIDES, anchors=ANCH_PAIRS, bsz=bsz)

    out_shape = tuple(
        [jax.ShapeDtypeStruct((bsz, NA, NO, hw), jnp.float32) for hw in hws]
        + [jax.ShapeDtypeStruct((bsz, NO, total), jnp.float32)])

    outs = pl.pallas_call(kernel, out_shape=out_shape)(x_bd, w_cat, b_cat)

    # restore the module's layouts with cheap XLA transposes (wrapper-side).
    p_list = [outs[i].reshape(bsz, NA, NO, spatial[i][0], spatial[i][1])
                     .transpose(0, 1, 3, 4, 2) for i in range(NL)]
    z = outs[NL].transpose(0, 2, 1)                     # (B, total, NO)
    return z, p_list


# --------------------------- parameters (deterministic) ----------------------
def init_detect_params(key):
    """nn.Conv2d(c, NA*NO, 1) weights + YOLOv5 _initialize_biases bias init."""
    ws, bs = [], []
    for i, c in enumerate(CH):
        key, k = jax.random.split(key)
        w = jax.random.normal(k, (NA * NO, c), dtype=jnp.float32) * 0.05
        b = jnp.zeros((NA, NO), jnp.float32)
        b = b.at[:, 4].add(math.log(8.0 / (640.0 / STRIDES[i]) ** 2))
        b = b.at[:, 5:].add(math.log(0.6 / (NC - 0.99)))
        ws.append(w)
        bs.append(b.reshape(NA * NO, 1))
    return ws, bs


def make_grid(nx, ny):
    yv, xv = jnp.meshgrid(jnp.arange(ny), jnp.arange(nx), indexing="ij")
    return jnp.stack((xv, yv), axis=2).astype(jnp.float32)   # (ny, nx, 2)


# --------------------------- pure-JAX reference -------------------------------
def reference(xs, ws, bs):
    z, outs = [], []
    for i, x in enumerate(xs):
        b, c, ny, nx = x.shape
        p = jnp.einsum("bchw,nc->bnhw", x, ws[i]) + bs[i].reshape(1, NA * NO, 1, 1)
        p5 = p.reshape(b, NA, NO, ny, nx).transpose(0, 1, 3, 4, 2)
        outs.append(p5)
        s = jax.nn.sigmoid(p5)
        g = make_grid(nx, ny)[None, None]                       # (1,1,ny,nx,2)
        anc = ANCH_PIX[i].reshape(1, NA, 1, 1, 2)
        y = jnp.concatenate(
            [(s[..., 0:2] * 2.0 - 0.5 + g) * STRIDES[i],
             (s[..., 2:4] * 2.0) ** 2 * anc,
             s[..., 4:]], axis=-1)
        z.append(y.reshape(b, -1, NO))
    return jnp.concatenate(z, axis=1), outs


# ------------------------------------ main ------------------------------------
if __name__ == "__main__":
    key = jax.random.PRNGKey(0)
    kparams, k0, k1, k2 = jax.random.split(key, 4)

    ws, bs = init_detect_params(kparams)

    # Multi-scale feature maps (NCHW), as would be produced by the backbone.
    xs = [
        jax.random.normal(k0, (2, CH[0], 16, 16), dtype=jnp.float32),
        jax.random.normal(k1, (2, CH[1], 8, 8), dtype=jnp.float32),
        jax.random.normal(k2, (2, CH[2], 4, 4), dtype=jnp.float32),
    ]

    z_pal, x_pal = detect_forward(xs, ws, bs)
    jax.block_until_ready(z_pal)
    for t in x_pal:
        jax.block_until_ready(t)

    z_ref, x_ref = reference(xs, ws, bs)

    assert z_pal.shape == (2, NA * (16 * 16 + 8 * 8 + 4 * 4), NO), z_pal.shape
    assert jnp.allclose(z_pal, z_ref, atol=1e-4, rtol=1e-4)
    for a, b in zip(x_pal, x_ref):
        assert a.shape == b.shape
        assert jnp.allclose(a, b, atol=1e-4, rtol=1e-4)

    print("KERNEL_OK")
</pallas_src>

<mosaic_0001>
module attributes {stable_mosaic.version = 11 : i64} {
  func.func @_detect_head_kernel(%arg0: memref<112x672xf32, #tpu.memory_space<vmem>>, %arg1: memref<24x112xf32, #tpu.memory_space<vmem>>, %arg2: memref<24x3xf32, #tpu.memory_space<vmem>>, %arg3: memref<2x3x8x256xf32, #tpu.memory_space<vmem>>, %arg4: memref<2x3x8x64xf32, #tpu.memory_space<vmem>>, %arg5: memref<2x3x8x16xf32, #tpu.memory_space<vmem>>, %arg6: memref<2x8x1008xf32, #tpu.memory_space<vmem>>) attributes {dimension_semantics = [], scalar_prefetch = 0 : i64, scratch_operands = 0 : i64, tpu.core_type = #tpu.core_type<tc>} {
    %c0 = arith.constant 0 : index
    %c0_0 = arith.constant 0 : index
    %0 = vector.load %arg1[%c0, %c0_0] : memref<24x112xf32, #tpu.memory_space<vmem>>, vector<24x112xf32>
    %c0_1 = arith.constant 0 : index
    %c0_2 = arith.constant 0 : index
    %1 = vector.load %arg0[%c0_1, %c0_2] : memref<112x672xf32, #tpu.memory_space<vmem>>, vector<112x672xf32>
    %cst = arith.constant dense<0.000000e+00> : vector<24x672xf32>
    %2 = tpu.matmul %0, %1, %cst {dimension_numbers = #tpu.dot_dimension_numbers<[1], [0], [0], [1], [0, 0, 1, 1], [], []>} : vector<24x112xf32>, vector<112x672xf32>, vector<24x672xf32> -> vector<24x672xf32>
    %c0_3 = arith.constant 0 : index
    %c0_4 = arith.constant 0 : index
    %3 = vector.load %arg2[%c0_3, %c0_4] : memref<24x3xf32, #tpu.memory_space<vmem>>, vector<24x3xf32>
    %4 = tpu.iota {dimensions = array<i32: 1>} : vector<1x256xi32>
    %c4_i32 = arith.constant 4 : i32
    %5 = vector.broadcast %c4_i32 : i32 to vector<1x256xi32>
    %6 = arith.shrsi %4, %5 : vector<1x256xi32>
    %7 = arith.sitofp %6 : vector<1x256xi32> to vector<1x256xf32>
    %c15_i32 = arith.constant 15 : i32
    %8 = vector.broadcast %c15_i32 : i32 to vector<1x256xi32>
    %9 = arith.andi %4, %8 : vector<1x256xi32>
    %10 = arith.sitofp %9 : vector<1x256xi32> to vector<1x256xf32>
    %11 = tpu.iota {dimensions = array<i32: 0>} : vector<8x256xi32>
    %c0_i32 = arith.constant 0 : i32
    %12 = vector.broadcast %c0_i32 : i32 to vector<8x256xi32>
    %13 = arith.cmpi eq, %11, %12 : vector<8x256xi32>
    %14 = vector.shape_cast %10 : vector<1x256xf32> to vector<1x256xf32>
    %15 = vector.broadcast %14 : vector<1x256xf32> to vector<8x256xf32>
    %16 = vector.shape_cast %7 : vector<1x256xf32> to vector<1x256xf32>
    %17 = vector.broadcast %16 : vector<1x256xf32> to vector<8x256xf32>
    %18 = arith.select %13, %15, %17 : vector<8x256xi1>, vector<8x256xf32>
    %19 = vector.extract_strided_slice %3 {offsets = [0, 0], sizes = [8, 1], strides = [1, 1]} : vector<24x3xf32> to vector<8x1xf32>
    %c2_i32 = arith.constant 2 : i32
    %20 = vector.broadcast %c2_i32 : i32 to vector<8x256xi32>
    %21 = arith.cmpi eq, %11, %20 : vector<8x256xi32>
    %cst_5 = arith.constant 1.000000e+01 : f32
    %cst_6 = arith.constant 1.300000e+01 : f32
    %22 = vector.broadcast %cst_5 : f32 to vector<8x256xf32>
    %23 = vector.broadcast %cst_6 : f32 to vector<8x256xf32>
    %24 = arith.select %21, %22, %23 : vector<8x256xi1>, vector<8x256xf32>
    %25 = vector.extract_strided_slice %2 {offsets = [0, 0], sizes = [8, 256], strides = [1, 1]} : vector<24x672xf32> to vector<8x256xf32>
    %26 = vector.broadcast %19 : vector<8x1xf32> to vector<8x256xf32>
    %27 = arith.addf %25, %26 : vector<8x256xf32>
    %c0_7 = arith.constant 0 : index
    %c0_8 = arith.constant 0 : index
    %c0_9 = arith.constant 0 : index
    %c0_10 = arith.constant 0 : index
    %28 = vector.load %arg3[%c0_7, %c0_8, %c0_9, %c0_10] : memref<2x3x8x256xf32, #tpu.memory_space<vmem>>, vector<1x1x8x256xf32>
    %29 = vector.shape_cast %28 : vector<1x1x8x256xf32> to vector<8x256xf32>
    %30 = vector.shape_cast %27 : vector<8x256xf32> to vector<1x1x8x256xf32>
    tpu.vector_store %arg3[%c0_7, %c0_8, %c0_9, %c0_10], %30 {strides = array<i32>} : memref<2x3x8x256xf32, #tpu.memory_space<vmem>>, vector<1x1x8x256xf32>,
    %31 = arith.negf %27 : vector<8x256xf32>
    %32 = math.exp %31 : vector<8x256xf32>
    %cst_11 = arith.constant 1.000000e+00 : f32
    %33 = vector.broadcast %cst_11 : f32 to vector<8x256xf32>
    %34 = arith.addf %33, %32 : vector<8x256xf32>
    %35 = arith.divf %33, %34 : vector<8x256xf32>
    %cst_12 = arith.constant 2.000000e+00 : f32
    %36 = vector.broadcast %cst_12 : f32 to vector<8x256xf32>
    %37 = arith.mulf %35, %36 : vector<8x256xf32>
    %cst_13 = arith.constant 5.000000e-01 : f32
    %38 = vector.broadcast %cst_13 : f32 to vector<8x256xf32>
    %39 = arith.subf %37, %38 : vector<8x256xf32>
    %40 = arith.addf %39, %18 : vector<8x256xf32>
    %cst_14 = arith.constant 8.000000e+00 : f32
    %41 = vector.broadcast %cst_14 : f32 to vector<8x256xf32>
    %42 = arith.mulf %40, %41 : vector<8x256xf32>
    %cst_15 = arith.constant 2.000000e+00 : f32
    %43 = vector.broadcast %cst_15 : f32 to vector<8x256xf32>
    %44 = arith.mulf %35, %43 : vector<8x256xf32>
    %45 = arith.mulf %44, %44 : vector<8x256xf32>
    %46 = arith.mulf %45, %24 : vector<8x256xf32>
    %c2_i32_16 = arith.constant 2 : i32
    %47 = vector.broadcast %c2_i32_16 : i32 to vector<8x256xi32>
    %48 = arith.cmpi slt, %11, %47 : vector<8x256xi32>
    %c4_i32_17 = arith.constant 4 : i32
    %49 = vector.broadcast %c4_i32_17 : i32 to vector<8x256xi32>
    %50 = arith.cmpi slt, %11, %49 : vector<8x256xi32>
    %51 = arith.select %50, %46, %35 : vector<8x256xi1>, vector<8x256xf32>
    %52 = arith.select %48, %42, %51 : vector<8x256xi1>, vector<8x256xf32>
    %c0_18 = arith.constant 0 : index
    %c0_19 = arith.constant 0 : index
    %c0_20 = arith.constant 0 : index
    %53 = vector.load %arg6[%c0_18, %c0_19, %c0_20] : memref<2x8x1008xf32, #tpu.memory_space<vmem>>, vector<1x8x256xf32>
    %54 = vector.shape_cast %53 : vector<1x8x256xf32> to vector<8x256xf32>
    %55 = vector.shape_cast %52 : vector<8x256xf32> to vector<1x8x256xf32>
    tpu.vector_store %arg6[%c0_18, %c0_19, %c0_20], %55 {strides = array<i32>} : memref<2x8x1008xf32, #tpu.memory_space<vmem>>, vector<1x8x256xf32>,
    %56 = vector.extract_strided_slice %2 {offsets = [0, 256], sizes = [8, 256], strides = [1, 1]} : vector<24x672xf32> to vector<8x256xf32>
    %57 = vector.broadcast %19 : vector<8x1xf32> to vector<8x256xf32>
    %58 = arith.addf %56, %57 : vector<8x256xf32>
    %c1 = arith.constant 1 : index
    %c0_21 = arith.constant 0 : index
    %c0_22 = arith.constant 0 : index
    %c0_23 = arith.constant 0 : index
    %59 = vector.load %arg3[%c1, %c0_21, %c0_22, %c0_23] : memref<2x3x8x256xf32, #tpu.memory_space<vmem>>, vector<1x1x8x256xf32>
    %60 = vector.shape_cast %59 : vector<1x1x8x256xf32> to vector<8x256xf32>
    %61 = vector.shape_cast %58 : vector<8x256xf32> to vector<1x1x8x256xf32>
    tpu.vector_store %arg3[%c1, %c0_21, %c0_22, %c0_23], %61 {strides = array<i32>} : memref<2x3x8x256xf32, #tpu.memory_space<vmem>>, vector<1x1x8x256xf32>,
    %62 = arith.negf %58 : vector<8x256xf32>
    %63 = math.exp %62 : vector<8x256xf32>
    %cst_24 = arith.constant 1.000000e+00 : f32
    %64 = vector.broadcast %cst_24 : f32 to vector<8x256xf32>
    %65 = arith.addf %64, %63 : vector<8x256xf32>
    %66 = arith.divf %64, %65 : vector<8x256xf32>
    %cst_25 = arith.constant 2.000000e+00 : f32
    %67 = vector.broadcast %cst_25 : f32 to vector<8x256xf32>
    %68 = arith.mulf %66, %67 : vector<8x256xf32>
    %cst_26 = arith.constant 5.000000e-01 : f32
    %69 = vector.broadcast %cst_26 : f32 to vector<8x256xf32>
    %70 = arith.subf %68, %69 : vector<8x256xf32>
    %71 = arith.addf %70, %18 : vector<8x256xf32>
    %cst_27 = arith.constant 8.000000e+00 : f32
    %72 = vector.broadcast %cst_27 : f32 to vector<8x256xf32>
    %73 = arith.mulf %71, %72 : vector<8x256xf32>
    %cst_28 = arith.constant 2.000000e+00 : f32
    %74 = vector.broadcast %cst_28 : f32 to vector<8x256xf32>
    %75 = arith.mulf %66, %74 : vector<8x256xf32>
    %76 = arith.mulf %75, %75 : vector<8x256xf32>
    %77 = arith.mulf %76, %24 : vector<8x256xf32>
    %c2_i32_29 = arith.constant 2 : i32
    %78 = vector.broadcast %c2_i32_29 : i32 to vector<8x256xi32>
    %79 = arith.cmpi slt, %11, %78 : vector<8x256xi32>
    %c4_i32_30 = arith.constant 4 : i32
    %80 = vector.broadcast %c4_i32_30 : i32 to vector<8x256xi32>
    %81 = arith.cmpi slt, %11, %80 : vector<8x256xi32>
    %82 = arith.select %81, %77, %66 : vector<8x256xi1>, vector<8x256xf32>
    %83 = arith.select %79, %73, %82 : vector<8x256xi1>, vector<8x256xf32>
    %c1_31 = arith.constant 1 : index
    %c0_32 = arith.constant 0 : index
    %c0_33 = arith.constant 0 : index
    %84 = vector.load %arg6[%c1_31, %c0_32, %c0_33] : memref<2x8x1008xf32, #tpu.memory_space<vmem>>, vector<1x8x256xf32>
    %85 = vector.shape_cast %84 : vector<1x8x256xf32> to vector<8x256xf32>
    %86 = vector.shape_cast %83 : vector<8x256xf32> to vector<1x8x256xf32>
    tpu.vector_store %arg6[%c1_31, %c0_32, %c0_33], %86 {strides = array<i32>} : memref<2x8x1008xf32, #tpu.memory_space<vmem>>, vector<1x8x256xf32>,
    %87 = vector.extract_strided_slice %3 {offsets = [8, 0], sizes = [8, 1], strides = [1, 1]} : vector<24x3xf32> to vector<8x1xf32>
    %c2_i32_34 = arith.constant 2 : i32
    %88 = vector.broadcast %c2_i32_34 : i32 to vector<8x256xi32>
    %89 = arith.cmpi eq, %11, %88 : vector<8x256xi32>
    %cst_35 = arith.constant 1.600000e+01 : f32
    %cst_36 = arith.constant 3.000000e+01 : f32
    %90 = vector.broadcast %cst_35 : f32 to vector<8x256xf32>
    %91 = vector.broadcast %cst_36 : f32 to vector<8x256xf32>
    %92 = arith.select %89, %90, %91 : vector<8x256xi1>, vector<8x256xf32>
    %93 = vector.extract_strided_slice %2 {offsets = [8, 0], sizes = [8, 256], strides = [1, 1]} : vector<24x672xf32> to vector<8x256xf32>
    %94 = vector.broadcast %87 : vector<8x1xf32> to vector<8x256xf32>
    %95 = arith.addf %93, %94 : vector<8x256xf32>
    %c0_37 = arith.constant 0 : index
    %c1_38 = arith.constant 1 : index
    %c0_39 = arith.constant 0 : index
    %c0_40 = arith.constant 0 : index
    %96 = vector.load %arg3[%c0_37, %c1_38, %c0_39, %c0_40] : memref<2x3x8x256xf32, #tpu.memory_space<vmem>>, vector<1x1x8x256xf32>
    %97 = vector.shape_cast %96 : vector<1x1x8x256xf32> to vector<8x256xf32>
    %98 = vector.shape_cast %95 : vector<8x256xf32> to vector<1x1x8x256xf32>
    tpu.vector_store %arg3[%c0_37, %c1_38, %c0_39, %c0_40], %98 {strides = array<i32>} : memref<2x3x8x256xf32, #tpu.memory_space<vmem>>, vector<1x1x8x256xf32>,
    %99 = arith.negf %95 : vector<8x256xf32>
    %100 = math.exp %99 : vector<8x256xf32>
    %cst_41 = arith.constant 1.000000e+00 : f32
    %101 = vector.broadcast %cst_41 : f32 to vector<8x256xf32>
    %102 = arith.addf %101, %100 : vector<8x256xf32>
    %103 = arith.divf %101, %102 : vector<8x256xf32>
    %cst_42 = arith.constant 2.000000e+00 : f32
    %104 = vector.broadcast %cst_42 : f32 to vector<8x256xf32>
    %105 = arith.mulf %103, %104 : vector<8x256xf32>
    %cst_43 = arith.constant 5.000000e-01 : f32
    %106 = vector.broadcast %cst_43 : f32 to vector<8x256xf32>
    %107 = arith.subf %105, %106 : vector<8x256xf32>
    %108 = arith.addf %107, %18 : vector<8x256xf32>
    %cst_44 = arith.constant 8.000000e+00 : f32
    %109 = vector.broadcast %cst_44 : f32 to vector<8x256xf32>
    %110 = arith.mulf %108, %109 : vector<8x256xf32>
    %cst_45 = arith.constant 2.000000e+00 : f32
    %111 = vector.broadcast %cst_45 : f32 to vector<8x256xf32>
    %112 = arith.mulf %103, %111 : vector<8x256xf32>
    %113 = arith.mulf %112, %112 : vector<8x256xf32>
    %114 = arith.mulf %113, %92 : vector<8x256xf32>
    %c2_i32_46 = arith.constant 2 : i32
    %115 = vector.broadcast %c2_i32_46 : i32 to vector<8x256xi32>
    %116 = arith.cmpi slt, %11, %115 : vector<8x256xi32>
    %c4_i32_47 = arith.constant 4 : i32
    %117 = vector.broadcast %c4_i32_47 : i32 to vector<8x256xi32>
    %118 = arith.cmpi slt, %11, %117 : vector<8x256xi32>
    %119 = arith.select %118, %114, %103 : vector<8x256xi1>, vector<8x256xf32>
    %120 = arith.select %116, %110, %119 : vector<8x256xi1>, vector<8x256xf32>
    %c0_48 = arith.constant 0 : index
    %c0_49 = arith.constant 0 : index
    %c256 = arith.constant 256 : index
    %121 = vector.load %arg6[%c0_48, %c0_49, %c256] : memref<2x8x1008xf32, #tpu.memory_space<vmem>>, vector<1x8x256xf32>
    %122 = vector.shape_cast %121 : vector<1x8x256xf32> to vector<8x256xf32>
    %123 = vector.shape_cast %120 : vector<8x256xf32> to vector<1x8x256xf32>
    tpu.vector_store %arg6[%c0_48, %c0_49, %c256], %123 {strides = array<i32>} : memref<2x8x1008xf32, #tpu.memory_space<vmem>>, vector<1x8x256xf32>,
    %124 = vector.extract_strided_slice %2 {offsets = [8, 256], sizes = [8, 256], strides = [1, 1]} : vector<24x672xf32> to vector<8x256xf32>
    %125 = vector.broadcast %87 : vector<8x1xf32> to vector<8x256xf32>
    %126 = arith.addf %124, %125 : vector<8x256xf32>
    %c1_50 = arith.constant 1 : index
    %c1_51 = arith.constant 1 : index
    %c0_52 = arith.constant 0 : index
    %c0_53 = arith.constant 0 : index
    %127 = vector.load %arg3[%c1_50, %c1_51, %c0_52, %c0_53] : memref<2x3x8x256xf32, #tpu.memory_space<vmem>>, vector<1x1x8x256xf32>
    %128 = vector.shape_cast %127 : vector<1x1x8x256xf32> to vector<8x256xf32>
    %129 = vector.shape_cast %126 : vector<8x256xf32> to vector<1x1x8x256xf32>
    tpu.vector_store %arg3[%c1_50, %c1_51, %c0_52, %c0_53], %129 {strides = array<i32>} : memref<2x3x8x256xf32, #tpu.memory_space<vmem>>, vector<1x1x8x256xf32>,
    %130 = arith.negf %126 : vector<8x256xf32>
    %131 = math.exp %130 : vector<8x256xf32>
    %cst_54 = arith.constant 1.000000e+00 : f32
    %132 = vector.broadcast %cst_54 : f32 to vector<8x256xf32>
    %133 = arith.addf %132, %131 : vector<8x256xf32>
    %134 = arith.divf %132, %133 : vector<8x256xf32>
    %cst_55 = arith.constant 2.000000e+00 : f32
    %135 = vector.broadcast %cst_55 : f32 to vector<8x256xf32>
    %136 = arith.mulf %134, %135 : vector<8x256xf32>
    %cst_56 = arith.constant 5.000000e-01 : f32
    %137 = vector.broadcast %cst_56 : f32 to vector<8x256xf32>
    %138 = arith.subf %136, %137 : vector<8x256xf32>
    %139 = arith.addf %138, %18 : vector<8x256xf32>
    %cst_57 = arith.constant 8.000000e+00 : f32
    %140 = vector.broadcast %cst_57 : f32 to vector<8x256xf32>
    %141 = arith.mulf %139, %140 : vector<8x256xf32>
    %cst_58 = arith.constant 2.000000e+00 : f32
    %142 = vector.broadcast %cst_58 : f32 to vector<8x256xf32>
    %143 = arith.mulf %134, %142 : vector<8x256xf32>
    %144 = arith.mulf %143, %143 : vector<8x256xf32>
    %145 = arith.mulf %144, %92 : vector<8x256xf32>
    %c2_i32_59 = arith.constant 2 : i32
    %146 = vector.broadcast %c2_i32_59 : i32 to vector<8x256xi32>
    %147 = arith.cmpi slt, %11, %146 : vector<8x256xi32>
    %c4_i32_60 = arith.constant 4 : i32
    %148 = vector.broadcast %c4_i32_60 : i32 to vector<8x256xi32>
    %149 = arith.cmpi slt, %11, %148 : vector<8x256xi32>
    %150 = arith.select %149, %145, %134 : vector<8x256xi1>, vector<8x256xf32>
    %151 = arith.select %147, %141, %150 : vector<8x256xi1>, vector<8x256xf32>
    %c1_61 = arith.constant 1 : index
    %c0_62 = arith.constant 0 : index
    %c256_63 = arith.constant 256 : index
    %152 = vector.load %arg6[%c1_61, %c0_62, %c256_63] : memref<2x8x1008xf32, #tpu.memory_space<vmem>>, vector<1x8x256xf32>
    %153 = vector.shape_cast %152 : vector<1x8x256xf32> to vector<8x256xf32>
    %154 = vector.shape_cast %151 : vector<8x256xf32> to vector<1x8x256xf32>
    tpu.vector_store %arg6[%c1_61, %c0_62, %c256_63], %154 {strides = array<i32>} : memref<2x8x1008xf32, #tpu.memory_space<vmem>>, vector<1x8x256xf32>,
    %155 = vector.extract_strided_slice %3 {offsets = [16, 0], sizes = [8, 1], strides = [1, 1]} : vector<24x3xf32> to vector<8x1xf32>
    %c2_i32_64 = arith.constant 2 : i32
    %156 = vector.broadcast %c2_i32_64 : i32 to vector<8x256xi32>
    %157 = arith.cmpi eq, %11, %156 : vector<8x256xi32>
    %cst_65 = arith.constant 3.300000e+01 : f32
    %cst_66 = arith.constant 2.300000e+01 : f32
    %158 = vector.broadcast %cst_65 : f32 to vector<8x256xf32>
    %159 = vector.broadcast %cst_66 : f32 to vector<8x256xf32>
    %160 = arith.select %157, %158, %159 : vector<8x256xi1>, vector<8x256xf32>
    %161 = vector.extract_strided_slice %2 {offsets = [16, 0], sizes = [8, 256], strides = [1, 1]} : vector<24x672xf32> to vector<8x256xf32>
    %162 = vector.broadcast %155 : vector<8x1xf32> to vector<8x256xf32>
    %163 = arith.addf %161, %162 : vector<8x256xf32>
    %c0_67 = arith.constant 0 : index
    %c2 = arith.constant 2 : index
    %c0_68 = arith.constant 0 : index
    %c0_69 = arith.constant 0 : index
    %164 = vector.load %arg3[%c0_67, %c2, %c0_68, %c0_69] : memref<2x3x8x256xf32, #tpu.memory_space<vmem>>, vector<1x1x8x256xf32>
    %165 = vector.shape_cast %164 : vector<1x1x8x256xf32> to vector<8x256xf32>
    %166 = vector.shape_cast %163 : vector<8x256xf32> to vector<1x1x8x256xf32>
    tpu.vector_store %arg3[%c0_67, %c2, %c0_68, %c0_69], %166 {strides = array<i32>} : memref<2x3x8x256xf32, #tpu.memory_space<vmem>>, vector<1x1x8x256xf32>,
    %167 = arith.negf %163 : vector<8x256xf32>
    %168 = math.exp %167 : vector<8x256xf32>
    %cst_70 = arith.constant 1.000000e+00 : f32
    %169 = vector.broadcast %cst_70 : f32 to vector<8x256xf32>
    %170 = arith.addf %169, %168 : vector<8x256xf32>
    %171 = arith.divf %169, %170 : vector<8x256xf32>
    %cst_71 = arith.constant 2.000000e+00 : f32
    %172 = vector.broadcast %cst_71 : f32 to vector<8x256xf32>
    %173 = arith.mulf %171, %172 : vector<8x256xf32>
    %cst_72 = arith.constant 5.000000e-01 : f32
    %174 = vector.broadcast %cst_72 : f32 to vector<8x256xf32>
    %175 = arith.subf %173, %174 : vector<8x256xf32>
    %176 = arith.addf %175, %18 : vector<8x256xf32>
    %cst_73 = arith.constant 8.000000e+00 : f32
    %177 = vector.broadcast %cst_73 : f32 to vector<8x256xf32>
    %178 = arith.mulf %176, %177 : vector<8x256xf32>
    %cst_74 = arith.constant 2.000000e+00 : f32
    %179 = vector.broadcast %cst_74 : f32 to vector<8x256xf32>
    %180 = arith.mulf %171, %179 : vector<8x256xf32>
    %181 = arith.mulf %180, %180 : vector<8x256xf32>
    %182 = arith.mulf %181, %160 : vector<8x256xf32>
    %c2_i32_75 = arith.constant 2 : i32
    %183 = vector.broadcast %c2_i32_75 : i32 to vector<8x256xi32>
    %184 = arith.cmpi slt, %11, %183 : vector<8x256xi32>
    %c4_i32_76 = arith.constant 4 : i32
    %185 = vector.broadcast %c4_i32_76 : i32 to vector<8x256xi32>
    %186 = arith.cmpi slt, %11, %185 : vector<8x256xi32>
    %187 = arith.select %186, %182, %171 : vector<8x256xi1>, vector<8x256xf32>
    %188 = arith.select %184, %178, %187 : vector<8x256xi1>, vector<8x256xf32>
    %c0_77 = arith.constant 0 : index
    %c0_78 = arith.constant 0 : index
    %c512 = arith.constant 512 : index
    %189 = vector.load %arg6[%c0_77, %c0_78, %c512] : memref<2x8x1008xf32, #tpu.memory_space<vmem>>, vector<1x8x256xf32>
    %190 = vector.shape_cast %189 : vector<1x8x256xf32> to vector<8x256xf32>
    %191 = vector.shape_cast %188 : vector<8x256xf32> to vector<1x8x256xf32>
    tpu.vector_store %arg6[%c0_77, %c0_78, %c512], %191 {strides = array<i32>} : memref<2x8x1008xf32, #tpu.memory_space<vmem>>, vector<1x8x256xf32>,
    %192 = vector.extract_strided_slice %2 {offsets = [16, 256], sizes = [8, 256], strides = [1, 1]} : vector<24x672xf32> to vector<8x256xf32>
    %193 = vector.broadcast %155 : vector<8x1xf32> to vector<8x256xf32>
    %194 = arith.addf %192, %193 : vector<8x256xf32>
    %c1_79 = arith.constant 1 : index
    %c2_80 = arith.constant 2 : index
    %c0_81 = arith.constant 0 : index
    %c0_82 = arith.constant 0 : index
    %195 = vector.load %arg3[%c1_79, %c2_80, %c0_81, %c0_82] : memref<2x3x8x256xf32, #tpu.memory_space<vmem>>, vector<1x1x8x256xf32>
    %196 = vector.shape_cast %195 : vector<1x1x8x256xf32> to vector<8x256xf32>
    %197 = vector.shape_cast %194 : vector<8x256xf32> to vector<1x1x8x256xf32>
    tpu.vector_store %arg3[%c1_79, %c2_80, %c0_81, %c0_82], %197 {strides = array<i32>} : memref<2x3x8x256xf32, #tpu.memory_space<vmem>>, vector<1x1x8x256xf32>,
    %198 = arith.negf %194 : vector<8x256xf32>
    %199 = math.exp %198 : vector<8x256xf32>
    %cst_83 = arith.constant 1.000000e+00 : f32
    %200 = vector.broadcast %cst_83 : f32 to vector<8x256xf32>
    %201 = arith.addf %200, %199 : vector<8x256xf32>
    %202 = arith.divf %200, %201 : vector<8x256xf32>
    %cst_84 = arith.constant 2.000000e+00 : f32
    %203 = vector.broadcast %cst_84 : f32 to vector<8x256xf32>
    %204 = arith.mulf %202, %203 : vector<8x256xf32>
    %cst_85 = arith.constant 5.000000e-01 : f32
    %205 = vector.broadcast %cst_85 : f32 to vector<8x256xf32>
    %206 = arith.subf %204, %205 : vector<8x256xf32>
    %207 = arith.addf %206, %18 : vector<8x256xf32>
    %cst_86 = arith.constant 8.000000e+00 : f32
    %208 = vector.broadcast %cst_86 : f32 to vector<8x256xf32>
    %209 = arith.mulf %207, %208 : vector<8x256xf32>
    %cst_87 = arith.constant 2.000000e+00 : f32
    %210 = vector.broadcast %cst_87 : f32 to vector<8x256xf32>
    %211 = arith.mulf %202, %210 : vector<8x256xf32>
    %212 = arith.mulf %211, %211 : vector<8x256xf32>
    %213 = arith.mulf %212, %160 : vector<8x256xf32>
    %c2_i32_88 = arith.constant 2 : i32
    %214 = vector.broadcast %c2_i32_88 : i32 to vector<8x256xi32>
    %215 = arith.cmpi slt, %11, %214 : vector<8x256xi32>
    %c4_i32_89 = arith.constant 4 : i32
    %216 = vector.broadcast %c4_i32_89 : i32 to vector<8x256xi32>
    %217 = arith.cmpi slt, %11, %216 : vector<8x256xi32>
    %218 = arith.select %217, %213, %202 : vector<8x256xi1>, vector<8x256xf32>
    %219 = arith.select %215, %209, %218 : vector<8x256xi1>, vector<8x256xf32>
    %c1_90 = arith.constant 1 : index
    %c0_91 = arith.constant 0 : index
    %c512_92 = arith.constant 512 : index
    %220 = vector.load %arg6[%c1_90, %c0_91, %c512_92] : memref<2x8x1008xf32, #tpu.memory_space<vmem>>, vector<1x8x256xf32>
    %221 = vector.shape_cast %220 : vector<1x8x256xf32> to vector<8x256xf32>
    %222 = vector.shape_cast %219 : vector<8x256xf32> to vector<1x8x256xf32>
    tpu.vector_store %arg6[%c1_90, %c0_91, %c512_92], %222 {strides = array<i32>} : memref<2x8x1008xf32, #tpu.memory_space<vmem>>, vector<1x8x256xf32>,
    %223 = tpu.iota {dimensions = array<i32: 1>} : vector<1x64xi32>
    %c3_i32 = arith.constant 3 : i32
    %224 = vector.broadcast %c3_i32 : i32 to vector<1x64xi32>
    %225 = arith.shrsi %223, %224 : vector<1x64xi32>
    %226 = arith.sitofp %225 : vector<1x64xi32> to vector<1x64xf32>
    %c7_i32 = arith.constant 7 : i32
    %227 = vector.broadcast %c7_i32 : i32 to vector<1x64xi32>
    %228 = arith.andi %223, %227 : vector<1x64xi32>
    %229 = arith.sitofp %228 : vector<1x64xi32> to vector<1x64xf32>
    %230 = tpu.iota {dimensions = array<i32: 0>} : vector<8x64xi32>
    %c0_i32_93 = arith.constant 0 : i32
    %231 = vector.broadcast %c0_i32_93 : i32 to vector<8x64xi32>
    %232 = arith.cmpi eq, %230, %231 : vector<8x64xi32>
    %233 = vector.shape_cast %229 : vector<1x64xf32> to vector<1x64xf32>
    %234 = vector.broadcast %233 : vector<1x64xf32> to vector<8x64xf32>
    %235 = vector.shape_cast %226 : vector<1x64xf32> to vector<1x64xf32>
    %236 = vector.broadcast %235 : vector<1x64xf32> to vector<8x64xf32>
    %237 = arith.select %232, %234, %236 : vector<8x64xi1>, vector<8x64xf32>
    %238 = vector.extract_strided_slice %3 {offsets = [0, 1], sizes = [8, 1], strides = [1, 1]} : vector<24x3xf32> to vector<8x1xf32>
    %c2_i32_94 = arith.constant 2 : i32
    %239 = vector.broadcast %c2_i32_94 : i32 to vector<8x64xi32>
    %240 = arith.cmpi eq, %230, %239 : vector<8x64xi32>
    %cst_95 = arith.constant 3.000000e+01 : f32
    %cst_96 = arith.constant 6.100000e+01 : f32
    %241 = vector.broadcast %cst_95 : f32 to vector<8x64xf32>
    %242 = vector.broadcast %cst_96 : f32 to vector<8x64xf32>
    %243 = arith.select %240, %241, %242 : vector<8x64xi1>, vector<8x64xf32>
    %244 = vector.extract_strided_slice %2 {offsets = [0, 512], sizes = [8, 64], strides = [1, 1]} : vector<24x672xf32> to vector<8x64xf32>
    %245 = vector.broadcast %238 : vector<8x1xf32> to vector<8x64xf32>
    %246 = arith.addf %244, %245 : vector<8x64xf32>
    %c0_97 = arith.constant 0 : index
    %c0_98 = arith.constant 0 : index
    %c0_99 = arith.constant 0 : index
    %c0_100 = arith.constant 0 : index
    %247 = vector.load %arg4[%c0_97, %c0_98, %c0_99, %c0_100] : memref<2x3x8x64xf32, #tpu.memory_space<vmem>>, vector<1x1x8x64xf32>
    %248 = vector.shape_cast %247 : vector<1x1x8x64xf32> to vector<8x64xf32>
    %249 = vector.shape_cast %246 : vector<8x64xf32> to vector<1x1x8x64xf32>
    tpu.vector_store %arg4[%c0_97, %c0_98, %c0_99, %c0_100], %249 {strides = array<i32>} : memref<2x3x8x64xf32, #tpu.memory_space<vmem>>, vector<1x1x8x64xf32>,
    %250 = arith.negf %246 : vector<8x64xf32>
    %251 = math.exp %250 : vector<8x64xf32>
    %cst_101 = arith.constant 1.000000e+00 : f32
    %252 = vector.broadcast %cst_101 : f32 to vector<8x64xf32>
    %253 = arith.addf %252, %251 : vector<8x64xf32>
    %254 = arith.divf %252, %253 : vector<8x64xf32>
    %cst_102 = arith.constant 2.000000e+00 : f32
    %255 = vector.broadcast %cst_102 : f32 to vector<8x64xf32>
    %256 = arith.mulf %254, %255 : vector<8x64xf32>
    %cst_103 = arith.constant 5.000000e-01 : f32
    %257 = vector.broadcast %cst_103 : f32 to vector<8x64xf32>
    %258 = arith.subf %256, %257 : vector<8x64xf32>
    %259 = arith.addf %258, %237 : vector<8x64xf32>
    %cst_104 = arith.constant 1.600000e+01 : f32
    %260 = vector.broadcast %cst_104 : f32 to vector<8x64xf32>
    %261 = arith.mulf %259, %260 : vector<8x64xf32>
    %cst_105 = arith.constant 2.000000e+00 : f32
    %262 = vector.broadcast %cst_105 : f32 to vector<8x64xf32>
    %263 = arith.mulf %254, %262 : vector<8x64xf32>
    %264 = arith.mulf %263, %263 : vector<8x64xf32>
    %265 = arith.mulf %264, %243 : vector<8x64xf32>
    %c2_i32_106 = arith.constant 2 : i32
    %266 = vector.broadcast %c2_i32_106 : i32 to vector<8x64xi32>
    %267 = arith.cmpi slt, %230, %266 : vector<8x64xi32>
    %c4_i32_107 = arith.constant 4 : i32
    %268 = vector.broadcast %c4_i32_107 : i32 to vector<8x64xi32>
    %269 = arith.cmpi slt, %230, %268 : vector<8x64xi32>
    %270 = arith.select %269, %265, %254 : vector<8x64xi1>, vector<8x64xf32>
    %271 = arith.select %267, %261, %270 : vector<8x64xi1>, vector<8x64xf32>
    %c0_108 = arith.constant 0 : index
    %c0_109 = arith.constant 0 : index
    %c768 = arith.constant 768 : index
    %272 = vector.load %arg6[%c0_108, %c0_109, %c768] : memref<2x8x1008xf32, #tpu.memory_space<vmem>>, vector<1x8x64xf32>
    %273 = vector.shape_cast %272 : vector<1x8x64xf32> to vector<8x64xf32>
    %274 = vector.shape_cast %271 : vector<8x64xf32> to vector<1x8x64xf32>
    tpu.vector_store %arg6[%c0_108, %c0_109, %c768], %274 {strides = array<i32>} : memref<2x8x1008xf32, #tpu.memory_space<vmem>>, vector<1x8x64xf32>,
    %275 = vector.extract_strided_slice %2 {offsets = [0, 576], sizes = [8, 64], strides = [1, 1]} : vector<24x672xf32> to vector<8x64xf32>
    %276 = vector.broadcast %238 : vector<8x1xf32> to vector<8x64xf32>
    %277 = arith.addf %275, %276 : vector<8x64xf32>
    %c1_110 = arith.constant 1 : index
    %c0_111 = arith.constant 0 : index
    %c0_112 = arith.constant 0 : index
    %c0_113 = arith.constant 0 : index
    %278 = vector.load %arg4[%c1_110, %c0_111, %c0_112, %c0_113] : memref<2x3x8x64xf32, #tpu.memory_space<vmem>>, vector<1x1x8x64xf32>
    %279 = vector.shape_cast %278 : vector<1x1x8x64xf32> to vector<8x64xf32>
    %280 = vector.shape_cast %277 : vector<8x64xf32> to vector<1x1x8x64xf32>
    tpu.vector_store %arg4[%c1_110, %c0_111, %c0_112, %c0_113], %280 {strides = array<i32>} : memref<2x3x8x64xf32, #tpu.memory_space<vmem>>, vector<1x1x8x64xf32>,
    %281 = arith.negf %277 : vector<8x64xf32>
    %282 = math.exp %281 : vector<8x64xf32>
    %cst_114 = arith.constant 1.000000e+00 : f32
    %283 = vector.broadcast %cst_114 : f32 to vector<8x64xf32>
    %284 = arith.addf %283, %282 : vector<8x64xf32>
    %285 = arith.divf %283, %284 : vector<8x64xf32>
    %cst_115 = arith.constant 2.000000e+00 : f32
    %286 = vector.broadcast %cst_115 : f32 to vector<8x64xf32>
    %287 = arith.mulf %285, %286 : vector<8x64xf32>
    %cst_116 = arith.constant 5.000000e-01 : f32
    %288 = vector.broadcast %cst_116 : f32 to vector<8x64xf32>
    %289 = arith.subf %287, %288 : vector<8x64xf32>
    %290 = arith.addf %289, %237 : vector<8x64xf32>
    %cst_117 = arith.constant 1.600000e+01 : f32
    %291 = vector.broadcast %cst_117 : f32 to vector<8x64xf32>
    %292 = arith.mulf %290, %291 : vector<8x64xf32>
    %cst_118 = arith.constant 2.000000e+00 : f32
    %293 = vector.broadcast %cst_118 : f32 to vector<8x64xf32>
    %294 = arith.mulf %285, %293 : vector<8x64xf32>
    %295 = arith.mulf %294, %294 : vector<8x64xf32>
    %296 = arith.mulf %295, %243 : vector<8x64xf32>
    %c2_i32_119 = arith.constant 2 : i32
    %297 = vector.broadcast %c2_i32_119 : i32 to vector<8x64xi32>
    %298 = arith.cmpi slt, %230, %297 : vector<8x64xi32>
    %c4_i32_120 = arith.constant 4 : i32
    %299 = vector.broadcast %c4_i32_120 : i32 to vector<8x64xi32>
    %300 = arith.cmpi slt, %230, %299 : vector<8x64xi32>
    %301 = arith.select %300, %296, %285 : vector<8x64xi1>, vector<8x64xf32>
    %302 = arith.select %298, %292, %301 : vector<8x64xi1>, vector<8x64xf32>
    %c1_121 = arith.constant 1 : index
    %c0_122 = arith.constant 0 : index
    %c768_123 = arith.constant 768 : index
    %303 = vector.load %arg6[%c1_121, %c0_122, %c768_123] : memref<2x8x1008xf32, #tpu.memory_space<vmem>>, vector<1x8x64xf32>
    %304 = vector.shape_cast %303 : vector<1x8x64xf32> to vector<8x64xf32>
    %305 = vector.shape_cast %302 : vector<8x64xf32> to vector<1x8x64xf32>
    tpu.vector_store %arg6[%c1_121, %c0_122, %c768_123], %305 {strides = array<i32>} : memref<2x8x1008xf32, #tpu.memory_space<vmem>>, vector<1x8x64xf32>,
    %306 = vector.extract_strided_slice %3 {offsets = [8, 1], sizes = [8, 1], strides = [1, 1]} : vector<24x3xf32> to vector<8x1xf32>
    %c2_i32_124 = arith.constant 2 : i32
    %307 = vector.broadcast %c2_i32_124 : i32 to vector<8x64xi32>
    %308 = arith.cmpi eq, %230, %307 : vector<8x64xi32>
    %cst_125 = arith.constant 6.200000e+01 : f32
    %cst_126 = arith.constant 4.500000e+01 : f32
    %309 = vector.broadcast %cst_125 : f32 to vector<8x64xf32>
    %310 = vector.broadcast %cst_126 : f32 to vector<8x64xf32>
    %311 = arith.select %308, %309, %310 : vector<8x64xi1>, vector<8x64xf32>
    %312 = vector.extract_strided_slice %2 {offsets = [8, 512], sizes = [8, 64], strides = [1, 1]} : vector<24x672xf32> to vector<8x64xf32>
    %313 = vector.broadcast %306 : vector<8x1xf32> to vector<8x64xf32>
    %314 = arith.addf %312, %313 : vector<8x64xf32>
    %c0_127 = arith.constant 0 : index
    %c1_128 = arith.constant 1 : index
    %c0_129 = arith.constant 0 : index
    %c0_130 = arith.constant 0 : index
    %315 = vector.load %arg4[%c0_127, %c1_128, %c0_129, %c0_130] : memref<2x3x8x64xf32, #tpu.memory_space<vmem>>, vector<1x1x8x64xf32>
    %316 = vector.shape_cast %315 : vector<1x1x8x64xf32> to vector<8x64xf32>
    %317 = vector.shape_cast %314 : vector<8x64xf32> to vector<1x1x8x64xf32>
    tpu.vector_store %arg4[%c0_127, %c1_128, %c0_129, %c0_130], %317 {strides = array<i32>} : memref<2x3x8x64xf32, #tpu.memory_space<vmem>>, vector<1x1x8x64xf32>,
    %318 = arith.negf %314 : vector<8x64xf32>
    %319 = math.exp %318 : vector<8x64xf32>
    %cst_131 = arith.constant 1.000000e+00 : f32
    %320 = vector.broadcast %cst_131 : f32 to vector<8x64xf32>
    %321 = arith.addf %320, %319 : vector<8x64xf32>
    %322 = arith.divf %320, %321 : vector<8x64xf32>
    %cst_132 = arith.constant 2.000000e+00 : f32
    %323 = vector.broadcast %cst_132 : f32 to vector<8x64xf32>
    %324 = arith.mulf %322, %323 : vector<8x64xf32>
    %cst_133 = arith.constant 5.000000e-01 : f32
    %325 = vector.broadcast %cst_133 : f32 to vector<8x64xf32>
    %326 = arith.subf %324, %325 : vector<8x64xf32>
    %327 = arith.addf %326, %237 : vector<8x64xf32>
    %cst_134 = arith.constant 1.600000e+01 : f32
    %328 = vector.broadcast %cst_134 : f32 to vector<8x64xf32>
    %329 = arith.mulf %327, %328 : vector<8x64xf32>
    %cst_135 = arith.constant 2.000000e+00 : f32
    %330 = vector.broadcast %cst_135 : f32 to vector<8x64xf32>
    %331 = arith.mulf %322, %330 : vector<8x64xf32>
    %332 = arith.mulf %331, %331 : vector<8x64xf32>
    %333 = arith.mulf %332, %311 : vector<8x64xf32>
    %c2_i32_136 = arith.constant 2 : i32
    %334 = vector.broadcast %c2_i32_136 : i32 to vector<8x64xi32>
    %335 = arith.cmpi slt, %230, %334 : vector<8x64xi32>
    %c4_i32_137 = arith.constant 4 : i32
    %336 = vector.broadcast %c4_i32_137 : i32 to vector<8x64xi32>
    %337 = arith.cmpi slt, %230, %336 : vector<8x64xi32>
    %338 = arith.select %337, %333, %322 : vector<8x64xi1>, vector<8x64xf32>
    %339 = arith.select %335, %329, %338 : vector<8x64xi1>, vector<8x64xf32>
    %c0_138 = arith.constant 0 : index
    %c0_139 = arith.constant 0 : index
    %c832 = arith.constant 832 : index
    %340 = vector.load %arg6[%c0_138, %c0_139, %c832] : memref<2x8x1008xf32, #tpu.memory_space<vmem>>, vector<1x8x64xf32>
    %341 = vector.shape_cast %340 : vector<1x8x64xf32> to vector<8x64xf32>
    %342 = vector.shape_cast %339 : vector<8x64xf32> to vector<1x8x64xf32>
    tpu.vector_store %arg6[%c0_138, %c0_139, %c832], %342 {strides = array<i32>} : memref<2x8x1008xf32, #tpu.memory_space<vmem>>, vector<1x8x64xf32>,
    %343 = vector.extract_strided_slice %2 {offsets = [8, 576], sizes = [8, 64], strides = [1, 1]} : vector<24x672xf32> to vector<8x64xf32>
    %344 = vector.broadcast %306 : vector<8x1xf32> to vector<8x64xf32>
    %345 = arith.addf %343, %344 : vector<8x64xf32>
    %c1_140 = arith.constant 1 : index
    %c1_141 = arith.constant 1 : index
    %c0_142 = arith.constant 0 : index
    %c0_143 = arith.constant 0 : index
    %346 = vector.load %arg4[%c1_140, %c1_141, %c0_142, %c0_143] : memref<2x3x8x64xf32, #tpu.memory_space<vmem>>, vector<1x1x8x64xf32>
    %347 = vector.shape_cast %346 : vector<1x1x8x64xf32> to vector<8x64xf32>
    %348 = vector.shape_cast %345 : vector<8x64xf32> to vector<1x1x8x64xf32>
    tpu.vector_store %arg4[%c1_140, %c1_141, %c0_142, %c0_143], %348 {strides = array<i32>} : memref<2x3x8x64xf32, #tpu.memory_space<vmem>>, vector<1x1x8x64xf32>,
    %349 = arith.negf %345 : vector<8x64xf32>
    %350 = math.exp %349 : vector<8x64xf32>
    %cst_144 = arith.constant 1.000000e+00 : f32
    %351 = vector.broadcast %cst_144 : f32 to vector<8x64xf32>
    %352 = arith.addf %351, %350 : vector<8x64xf32>
    %353 = arith.divf %351, %352 : vector<8x64xf32>
    %cst_145 = arith.constant 2.000000e+00 : f32
    %354 = vector.broadcast %cst_145 : f32 to vector<8x64xf32>
    %355 = arith.mulf %353, %354 : vector<8x64xf32>
    %cst_146 = arith.constant 5.000000e-01 : f32
    %356 = vector.broadcast %cst_146 : f32 to vector<8x64xf32>
    %357 = arith.subf %355, %356 : vector<8x64xf32>
    %358 = arith.addf %357, %237 : vector<8x64xf32>
    %cst_147 = arith.constant 1.600000e+01 : f32
    %359 = vector.broadcast %cst_147 : f32 to vector<8x64xf32>
    %360 = arith.mulf %358, %359 : vector<8x64xf32>
    %cst_148 = arith.constant 2.000000e+00 : f32
    %361 = vector.broadcast %cst_148 : f32 to vector<8x64xf32>
    %362 = arith.mulf %353, %361 : vector<8x64xf32>
    %363 = arith.mulf %362, %362 : vector<8x64xf32>
    %364 = arith.mulf %363, %311 : vector<8x64xf32>
    %c2_i32_149 = arith.constant 2 : i32
    %365 = vector.broadcast %c2_i32_149 : i32 to vector<8x64xi32>
    %366 = arith.cmpi slt, %230, %365 : vector<8x64xi32>
    %c4_i32_150 = arith.constant 4 : i32
    %367 = vector.broadcast %c4_i32_150 : i32 to vector<8x64xi32>
    %368 = arith.cmpi slt, %230, %367 : vector<8x64xi32>
    %369 = arith.select %368, %364, %353 : vector<8x64xi1>, vector<8x64xf32>
    %370 = arith.select %366, %360, %369 : vector<8x64xi1>, vector<8x64xf32>
    %c1_151 = arith.constant 1 : index
    %c0_152 = arith.constant 0 : index
    %c832_153 = arith.constant 832 : index
    %371 = vector.load %arg6[%c1_151, %c0_152, %c832_153] : memref<2x8x1008xf32, #tpu.memory_space<vmem>>, vector<1x8x64xf32>
    %372 = vector.shape_cast %371 : vector<1x8x64xf32> to vector<8x64xf32>
    %373 = vector.shape_cast %370 : vector<8x64xf32> to vector<1x8x64xf32>
    tpu.vector_store %arg6[%c1_151, %c0_152, %c832_153], %373 {strides = array<i32>} : memref<2x8x1008xf32, #tpu.memory_space<vmem>>, vector<1x8x64xf32>,
    %374 = vector.extract_strided_slice %3 {offsets = [16, 1], sizes = [8, 1], strides = [1, 1]} : vector<24x3xf32> to vector<8x1xf32>
    %c2_i32_154 = arith.constant 2 : i32
    %375 = vector.broadcast %c2_i32_154 : i32 to vector<8x64xi32>
    %376 = arith.cmpi eq, %230, %375 : vector<8x64xi32>
    %cst_155 = arith.constant 5.900000e+01 : f32
    %cst_156 = arith.constant 1.190000e+02 : f32
    %377 = vector.broadcast %cst_155 : f32 to vector<8x64xf32>
    %378 = vector.broadcast %cst_156 : f32 to vector<8x64xf32>
    %379 = arith.select %376, %377, %378 : vector<8x64xi1>, vector<8x64xf32>
    %380 = vector.extract_strided_slice %2 {offsets = [16, 512], sizes = [8, 64], strides = [1, 1]} : vector<24x672xf32> to vector<8x64xf32>
    %381 = vector.broadcast %374 : vector<8x1xf32> to vector<8x64xf32>
    %382 = arith.addf %380, %381 : vector<8x64xf32>
    %c0_157 = arith.constant 0 : index
    %c2_158 = arith.constant 2 : index
    %c0_159 = arith.constant 0 : index
    %c0_160 = arith.constant 0 : index
    %383 = vector.load %arg4[%c0_157, %c2_158, %c0_159, %c0_160] : memref<2x3x8x64xf32, #tpu.memory_space<vmem>>, vector<1x1x8x64xf32>
    %384 = vector.shape_cast %383 : vector<1x1x8x64xf32> to vector<8x64xf32>
    %385 = vector.shape_cast %382 : vector<8x64xf32> to vector<1x1x8x64xf32>
    tpu.vector_store %arg4[%c0_157, %c2_158, %c0_159, %c0_160], %385 {strides = array<i32>} : memref<2x3x8x64xf32, #tpu.memory_space<vmem>>, vector<1x1x8x64xf32>,
    %386 = arith.negf %382 : vector<8x64xf32>
    %387 = math.exp %386 : vector<8x64xf32>
    %cst_161 = arith.constant 1.000000e+00 : f32
    %388 = vector.broadcast %cst_161 : f32 to vector<8x64xf32>
    %389 = arith.addf %388, %387 : vector<8x64xf32>
    %390 = arith.divf %388, %389 : vector<8x64xf32>
    %cst_162 = arith.constant 2.000000e+00 : f32
    %391 = vector.broadcast %cst_162 : f32 to vector<8x64xf32>
    %392 = arith.mulf %390, %391 : vector<8x64xf32>
    %cst_163 = arith.constant 5.000000e-01 : f32
    %393 = vector.broadcast %cst_163 : f32 to vector<8x64xf32>
    %394 = arith.subf %392, %393 : vector<8x64xf32>
    %395 = arith.addf %394, %237 : vector<8x64xf32>
    %cst_164 = arith.constant 1.600000e+01 : f32
    %396 = vector.broadcast %cst_164 : f32 to vector<8x64xf32>
    %397 = arith.mulf %395, %396 : vector<8x64xf32>
    %cst_165 = arith.constant 2.000000e+00 : f32
    %398 = vector.broadcast %cst_165 : f32 to vector<8x64xf32>
    %399 = arith.mulf %390, %398 : vector<8x64xf32>
    %400 = arith.mulf %399, %399 : vector<8x64xf32>
    %401 = arith.mulf %400, %379 : vector<8x64xf32>
    %c2_i32_166 = arith.constant 2 : i32
    %402 = vector.broadcast %c2_i32_166 : i32 to vector<8x64xi32>
    %403 = arith.cmpi slt, %230, %402 : vector<8x64xi32>
    %c4_i32_167 = arith.constant 4 : i32
    %404 = vector.broadcast %c4_i32_167 : i32 to vector<8x64xi32>
    %405 = arith.cmpi slt, %230, %404 : vector<8x64xi32>
    %406 = arith.select %405, %401, %390 : vector<8x64xi1>, vector<8x64xf32>
    %407 = arith.select %403, %397, %406 : vector<8x64xi1>, vector<8x64xf32>
    %c0_168 = arith.constant 0 : index
    %c0_169 = arith.constant 0 : index
    %c896 = arith.constant 896 : index
    %408 = vector.load %arg6[%c0_168, %c0_169, %c896] : memref<2x8x1008xf32, #tpu.memory_space<vmem>>, vector<1x8x64xf32>
    %409 = vector.shape_cast %408 : vector<1x8x64xf32> to vector<8x64xf32>
    %410 = vector.shape_cast %407 : vector<8x64xf32> to vector<1x8x64xf32>
    tpu.vector_store %arg6[%c0_168, %c0_169, %c896], %410 {strides = array<i32>} : memref<2x8x1008xf32, #tpu.memory_space<vmem>>, vector<1x8x64xf32>,
    %411 = vector.extract_strided_slice %2 {offsets = [16, 576], sizes = [8, 64], strides = [1, 1]} : vector<24x672xf32> to vector<8x64xf32>
    %412 = vector.broadcast %374 : vector<8x1xf32> to vector<8x64xf32>
    %413 = arith.addf %411, %412 : vector<8x64xf32>
    %c1_170 = arith.constant 1 : index
    %c2_171 = arith.constant 2 : index
    %c0_172 = arith.constant 0 : index
    %c0_173 = arith.constant 0 : index
    %414 = vector.load %arg4[%c1_170, %c2_171, %c0_172, %c0_173] : memref<2x3x8x64xf32, #tpu.memory_space<vmem>>, vector<1x1x8x64xf32>
    %415 = vector.shape_cast %414 : vector<1x1x8x64xf32> to vector<8x64xf32>
    %416 = vector.shape_cast %413 : vector<8x64xf32> to vector<1x1x8x64xf32>
    tpu.vector_store %arg4[%c1_170, %c2_171, %c0_172, %c0_173], %416 {strides = array<i32>} : memref<2x3x8x64xf32, #tpu.memory_space<vmem>>, vector<1x1x8x64xf32>,
    %417 = arith.negf %413 : vector<8x64xf32>
    %418 = math.exp %417 : vector<8x64xf32>
    %cst_174 = arith.constant 1.000000e+00 : f32
    %419 = vector.broadcast %cst_174 : f32 to vector<8x64xf32>
    %420 = arith.addf %419, %418 : vector<8x64xf32>
    %421 = arith.divf %419, %420 : vector<8x64xf32>
    %cst_175 = arith.constant 2.000000e+00 : f32
    %422 = vector.broadcast %cst_175 : f32 to vector<8x64xf32>
    %423 = arith.mulf %421, %422 : vector<8x64xf32>
    %cst_176 = arith.constant 5.000000e-01 : f32
    %424 = vector.broadcast %cst_176 : f32 to vector<8x64xf32>
    %425 = arith.subf %423, %424 : vector<8x64xf32>
    %426 = arith.addf %425, %237 : vector<8x64xf32>
    %cst_177 = arith.constant 1.600000e+01 : f32
    %427 = vector.broadcast %cst_177 : f32 to vector<8x64xf32>
    %428 = arith.mulf %426, %427 : vector<8x64xf32>
    %cst_178 = arith.constant 2.000000e+00 : f32
    %429 = vector.broadcast %cst_178 : f32 to vector<8x64xf32>
    %430 = arith.mulf %421, %429 : vector<8x64xf32>
    %431 = arith.mulf %430, %430 : vector<8x64xf32>
    %432 = arith.mulf %431, %379 : vector<8x64xf32>
    %c2_i32_179 = arith.constant 2 : i32
    %433 = vector.broadcast %c2_i32_179 : i32 to vector<8x64xi32>
    %434 = arith.cmpi slt, %230, %433 : vector<8x64xi32>
    %c4_i32_180 = arith.constant 4 : i32
    %435 = vector.broadcast %c4_i32_180 : i32 to vector<8x64xi32>
    %436 = arith.cmpi slt, %230, %435 : vector<8x64xi32>
    %437 = arith.select %436, %432, %421 : vector<8x64xi1>, vector<8x64xf32>
    %438 = arith.select %434, %428, %437 : vector<8x64xi1>, vector<8x64xf32>
    %c1_181 = arith.constant 1 : index
    %c0_182 = arith.constant 0 : index
    %c896_183 = arith.constant 896 : index
    %439 = vector.load %arg6[%c1_181, %c0_182, %c896_183] : memref<2x8x1008xf32, #tpu.memory_space<vmem>>, vector<1x8x64xf32>
    %440 = vector.shape_cast %439 : vector<1x8x64xf32> to vector<8x64xf32>
    %441 = vector.shape_cast %438 : vector<8x64xf32> to vector<1x8x64xf32>
    tpu.vector_store %arg6[%c1_181, %c0_182, %c896_183], %441 {strides = array<i32>} : memref<2x8x1008xf32, #tpu.memory_space<vmem>>, vector<1x8x64xf32>,
    %442 = tpu.iota {dimensions = array<i32: 1>} : vector<1x16xi32>
    %c2_i32_184 = arith.constant 2 : i32
    %443 = vector.broadcast %c2_i32_184 : i32 to vector<1x16xi32>
    %444 = arith.shrsi %442, %443 : vector<1x16xi32>
    %445 = arith.sitofp %444 : vector<1x16xi32> to vector<1x16xf32>
    %c3_i32_185 = arith.constant 3 : i32
    %446 = vector.broadcast %c3_i32_185 : i32 to vector<1x16xi32>
    %447 = arith.andi %442, %446 : vector<1x16xi32>
    %448 = arith.sitofp %447 : vector<1x16xi32> to vector<1x16xf32>
    %449 = tpu.iota {dimensions = array<i32: 0>} : vector<8x16xi32>
    %c0_i32_186 = arith.constant 0 : i32
    %450 = vector.broadcast %c0_i32_186 : i32 to vector<8x16xi32>
    %451 = arith.cmpi eq, %449, %450 : vector<8x16xi32>
    %452 = vector.shape_cast %448 : vector<1x16xf32> to vector<1x16xf32>
    %453 = vector.broadcast %452 : vector<1x16xf32> to vector<8x16xf32>
    %454 = vector.shape_cast %445 : vector<1x16xf32> to vector<1x16xf32>
    %455 = vector.broadcast %454 : vector<1x16xf32> to vector<8x16xf32>
    %456 = arith.select %451, %453, %455 : vector<8x16xi1>, vector<8x16xf32>
    %457 = vector.extract_strided_slice %3 {offsets = [0, 2], sizes = [8, 1], strides = [1, 1]} : vector<24x3xf32> to vector<8x1xf32>
    %c2_i32_187 = arith.constant 2 : i32
    %458 = vector.broadcast %c2_i32_187 : i32 to vector<8x16xi32>
    %459 = arith.cmpi eq, %449, %458 : vector<8x16xi32>
    %cst_188 = arith.constant 1.160000e+02 : f32
    %cst_189 = arith.constant 9.000000e+01 : f32
    %460 = vector.broadcast %cst_188 : f32 to vector<8x16xf32>
    %461 = vector.broadcast %cst_189 : f32 to vector<8x16xf32>
    %462 = arith.select %459, %460, %461 : vector<8x16xi1>, vector<8x16xf32>
    %463 = vector.extract_strided_slice %2 {offsets = [0, 640], sizes = [8, 16], strides = [1, 1]} : vector<24x672xf32> to vector<8x16xf32>
    %464 = vector.broadcast %457 : vector<8x1xf32> to vector<8x16xf32>
    %465 = arith.addf %463, %464 : vector<8x16xf32>
    %c0_190 = arith.constant 0 : index
    %c0_191 = arith.constant 0 : index
    %c0_192 = arith.constant 0 : index
    %c0_193 = arith.constant 0 : index
    %466 = vector.load %arg5[%c0_190, %c0_191, %c0_192, %c0_193] : memref<2x3x8x16xf32, #tpu.memory_space<vmem>>, vector<1x1x8x16xf32>
    %467 = vector.shape_cast %466 : vector<1x1x8x16xf32> to vector<8x16xf32>
    %468 = vector.shape_cast %465 : vector<8x16xf32> to vector<1x1x8x16xf32>
    tpu.vector_store %arg5[%c0_190, %c0_191, %c0_192, %c0_193], %468 {strides = array<i32>} : memref<2x3x8x16xf32, #tpu.memory_space<vmem>>, vector<1x1x8x16xf32>,
    %469 = arith.negf %465 : vector<8x16xf32>
    %470 = math.exp %469 : vector<8x16xf32>
    %cst_194 = arith.constant 1.000000e+00 : f32
    %471 = vector.broadcast %cst_194 : f32 to vector<8x16xf32>
    %472 = arith.addf %471, %470 : vector<8x16xf32>
    %473 = arith.divf %471, %472 : vector<8x16xf32>
    %cst_195 = arith.constant 2.000000e+00 : f32
    %474 = vector.broadcast %cst_195 : f32 to vector<8x16xf32>
    %475 = arith.mulf %473, %474 : vector<8x16xf32>
    %cst_196 = arith.constant 5.000000e-01 : f32
    %476 = vector.broadcast %cst_196 : f32 to vector<8x16xf32>
    %477 = arith.subf %475, %476 : vector<8x16xf32>
    %478 = arith.addf %477, %456 : vector<8x16xf32>
    %cst_197 = arith.constant 3.200000e+01 : f32
    %479 = vector.broadcast %cst_197 : f32 to vector<8x16xf32>
    %480 = arith.mulf %478, %479 : vector<8x16xf32>
    %cst_198 = arith.constant 2.000000e+00 : f32
    %481 = vector.broadcast %cst_198 : f32 to vector<8x16xf32>
    %482 = arith.mulf %473, %481 : vector<8x16xf32>
    %483 = arith.mulf %482, %482 : vector<8x16xf32>
    %484 = arith.mulf %483, %462 : vector<8x16xf32>
    %c2_i32_199 = arith.constant 2 : i32
    %485 = vector.broadcast %c2_i32_199 : i32 to vector<8x16xi32>
    %486 = arith.cmpi slt, %449, %485 : vector<8x16xi32>
    %c4_i32_200 = arith.constant 4 : i32
    %487 = vector.broadcast %c4_i32_200 : i32 to vector<8x16xi32>
    %488 = arith.cmpi slt, %449, %487 : vector<8x16xi32>
    %489 = arith.select %488, %484, %473 : vector<8x16xi1>, vector<8x16xf32>
    %490 = arith.select %486, %480, %489 : vector<8x16xi1>, vector<8x16xf32>
    %c0_201 = arith.constant 0 : index
    %c0_202 = arith.constant 0 : index
    %c960 = arith.constant 960 : index
    %491 = vector.load %arg6[%c0_201, %c0_202, %c960] : memref<2x8x1008xf32, #tpu.memory_space<vmem>>, vector<1x8x16xf32>
    %492 = vector.shape_cast %491 : vector<1x8x16xf32> to vector<8x16xf32>
    %493 = vector.shape_cast %490 : vector<8x16xf32> to vector<1x8x16xf32>
    tpu.vector_store %arg6[%c0_201, %c0_202, %c960], %493 {strides = array<i32>} : memref<2x8x1008xf32, #tpu.memory_space<vmem>>, vector<1x8x16xf32>,
    %494 = vector.extract_strided_slice %2 {offsets = [0, 656], sizes = [8, 16], strides = [1, 1]} : vector<24x672xf32> to vector<8x16xf32>
    %495 = vector.broadcast %457 : vector<8x1xf32> to vector<8x16xf32>
    %496 = arith.addf %494, %495 : vector<8x16xf32>
    %c1_203 = arith.constant 1 : index
    %c0_204 = arith.constant 0 : index
    %c0_205 = arith.constant 0 : index
    %c0_206 = arith.constant 0 : index
    %497 = vector.load %arg5[%c1_203, %c0_204, %c0_205, %c0_206] : memref<2x3x8x16xf32, #tpu.memory_space<vmem>>, vector<1x1x8x16xf32>
    %498 = vector.shape_cast %497 : vector<1x1x8x16xf32> to vector<8x16xf32>
    %499 = vector.shape_cast %496 : vector<8x16xf32> to vector<1x1x8x16xf32>
    tpu.vector_store %arg5[%c1_203, %c0_204, %c0_205, %c0_206], %499 {strides = array<i32>} : memref<2x3x8x16xf32, #tpu.memory_space<vmem>>, vector<1x1x8x16xf32>,
    %500 = arith.negf %496 : vector<8x16xf32>
    %501 = math.exp %500 : vector<8x16xf32>
    %cst_207 = arith.constant 1.000000e+00 : f32
    %502 = vector.broadcast %cst_207 : f32 to vector<8x16xf32>
    %503 = arith.addf %502, %501 : vector<8x16xf32>
    %504 = arith.divf %502, %503 : vector<8x16xf32>
    %cst_208 = arith.constant 2.000000e+00 : f32
    %505 = vector.broadcast %cst_208 : f32 to vector<8x16xf32>
    %506 = arith.mulf %504, %505 : vector<8x16xf32>
    %cst_209 = arith.constant 5.000000e-01 : f32
    %507 = vector.broadcast %cst_209 : f32 to vector<8x16xf32>
    %508 = arith.subf %506, %507 : vector<8x16xf32>
    %509 = arith.addf %508, %456 : vector<8x16xf32>
    %cst_210 = arith.constant 3.200000e+01 : f32
    %510 = vector.broadcast %cst_210 : f32 to vector<8x16xf32>
    %511 = arith.mulf %509, %510 : vector<8x16xf32>
    %cst_211 = arith.constant 2.000000e+00 : f32
    %512 = vector.broadcast %cst_211 : f32 to vector<8x16xf32>
    %513 = arith.mulf %504, %512 : vector<8x16xf32>
    %514 = arith.mulf %513, %513 : vector<8x16xf32>
    %515 = arith.mulf %514, %462 : vector<8x16xf32>
    %c2_i32_212 = arith.constant 2 : i32
    %516 = vector.broadcast %c2_i32_212 : i32 to vector<8x16xi32>
    %517 = arith.cmpi slt, %449, %516 : vector<8x16xi32>
    %c4_i32_213 = arith.constant 4 : i32
    %518 = vector.broadcast %c4_i32_213 : i32 to vector<8x16xi32>
    %519 = arith.cmpi slt, %449, %518 : vector<8x16xi32>
    %520 = arith.select %519, %515, %504 : vector<8x16xi1>, vector<8x16xf32>
    %521 = arith.select %517, %511, %520 : vector<8x16xi1>, vector<8x16xf32>
    %c1_214 = arith.constant 1 : index
    %c0_215 = arith.constant 0 : index
    %c960_216 = arith.constant 960 : index
    %522 = vector.load %arg6[%c1_214, %c0_215, %c960_216] : memref<2x8x1008xf32, #tpu.memory_space<vmem>>, vector<1x8x16xf32>
    %523 = vector.shape_cast %522 : vector<1x8x16xf32> to vector<8x16xf32>
    %524 = vector.shape_cast %521 : vector<8x16xf32> to vector<1x8x16xf32>
    tpu.vector_store %arg6[%c1_214, %c0_215, %c960_216], %524 {strides = array<i32>} : memref<2x8x1008xf32, #tpu.memory_space<vmem>>, vector<1x8x16xf32>,
    %525 = vector.extract_strided_slice %3 {offsets = [8, 2], sizes = [8, 1], strides = [1, 1]} : vector<24x3xf32> to vector<8x1xf32>
    %c2_i32_217 = arith.constant 2 : i32
    %526 = vector.broadcast %c2_i32_217 : i32 to vector<8x16xi32>
    %527 = arith.cmpi eq, %449, %526 : vector<8x16xi32>
    %cst_218 = arith.constant 1.560000e+02 : f32
    %cst_219 = arith.constant 1.980000e+02 : f32
    %528 = vector.broadcast %cst_218 : f32 to vector<8x16xf32>
    %529 = vector.broadcast %cst_219 : f32 to vector<8x16xf32>
    %530 = arith.select %527, %528, %529 : vector<8x16xi1>, vector<8x16xf32>
    %531 = vector.extract_strided_slice %2 {offsets = [8, 640], sizes = [8, 16], strides = [1, 1]} : vector<24x672xf32> to vector<8x16xf32>
    %532 = vector.broadcast %525 : vector<8x1xf32> to vector<8x16xf32>
    %533 = arith.addf %531, %532 : vector<8x16xf32>
    %c0_220 = arith.constant 0 : index
    %c1_221 = arith.constant 1 : index
    %c0_222 = arith.constant 0 : index
    %c0_223 = arith.constant 0 : index
    %534 = vector.load %arg5[%c0_220, %c1_221, %c0_222, %c0_223] : memref<2x3x8x16xf32, #tpu.memory_space<vmem>>, vector<1x1x8x16xf32>
    %535 = vector.shape_cast %534 : vector<1x1x8x16xf32> to vector<8x16xf32>
    %536 = vector.shape_cast %533 : vector<8x16xf32> to vector<1x1x8x16xf32>
    tpu.vector_store %arg5[%c0_220, %c1_221, %c0_222, %c0_223], %536 {strides = array<i32>} : memref<2x3x8x16xf32, #tpu.memory_space<vmem>>, vector<1x1x8x16xf32>,
    %537 = arith.negf %533 : vector<8x16xf32>
    %538 = math.exp %537 : vector<8x16xf32>
    %cst_224 = arith.constant 1.000000e+00 : f32
    %539 = vector.broadcast %cst_224 : f32 to vector<8x16xf32>
    %540 = arith.addf %539, %538 : vector<8x16xf32>
    %541 = arith.divf %539, %540 : vector<8x16xf32>
    %cst_225 = arith.constant 2.000000e+00 : f32
    %542 = vector.broadcast %cst_225 : f32 to vector<8x16xf32>
    %543 = arith.mulf %541, %542 : vector<8x16xf32>
    %cst_226 = arith.constant 5.000000e-01 : f32
    %544 = vector.broadcast %cst_226 : f32 to vector<8x16xf32>
    %545 = arith.subf %543, %544 : vector<8x16xf32>
    %546 = arith.addf %545, %456 : vector<8x16xf32>
    %cst_227 = arith.constant 3.200000e+01 : f32
    %547 = vector.broadcast %cst_227 : f32 to vector<8x16xf32>
    %548 = arith.mulf %546, %547 : vector<8x16xf32>
    %cst_228 = arith.constant 2.000000e+00 : f32
    %549 = vector.broadcast %cst_228 : f32 to vector<8x16xf32>
    %550 = arith.mulf %541, %549 : vector<8x16xf32>
    %551 = arith.mulf %550, %550 : vector<8x16xf32>
    %552 = arith.mulf %551, %530 : vector<8x16xf32>
    %c2_i32_229 = arith.constant 2 : i32
    %553 = vector.broadcast %c2_i32_229 : i32 to vector<8x16xi32>
    %554 = arith.cmpi slt, %449, %553 : vector<8x16xi32>
    %c4_i32_230 = arith.constant 4 : i32
    %555 = vector.broadcast %c4_i32_230 : i32 to vector<8x16xi32>
    %556 = arith.cmpi slt, %449, %555 : vector<8x16xi32>
    %557 = arith.select %556, %552, %541 : vector<8x16xi1>, vector<8x16xf32>
    %558 = arith.select %554, %548, %557 : vector<8x16xi1>, vector<8x16xf32>
    %c0_231 = arith.constant 0 : index
    %c0_232 = arith.constant 0 : index
    %c976 = arith.constant 976 : index
    %559 = vector.load %arg6[%c0_231, %c0_232, %c976] : memref<2x8x1008xf32, #tpu.memory_space<vmem>>, vector<1x8x16xf32>
    %560 = vector.shape_cast %559 : vector<1x8x16xf32> to vector<8x16xf32>
    %561 = vector.shape_cast %558 : vector<8x16xf32> to vector<1x8x16xf32>
    tpu.vector_store %arg6[%c0_231, %c0_232, %c976], %561 {strides = array<i32>} : memref<2x8x1008xf32, #tpu.memory_space<vmem>>, vector<1x8x16xf32>,
    %562 = vector.extract_strided_slice %2 {offsets = [8, 656], sizes = [8, 16], strides = [1, 1]} : vector<24x672xf32> to vector<8x16xf32>
    %563 = vector.broadcast %525 : vector<8x1xf32> to vector<8x16xf32>
    %564 = arith.addf %562, %563 : vector<8x16xf32>
    %c1_233 = arith.constant 1 : index
    %c1_234 = arith.constant 1 : index
    %c0_235 = arith.constant 0 : index
    %c0_236 = arith.constant 0 : index
    %565 = vector.load %arg5[%c1_233, %c1_234, %c0_235, %c0_236] : memref<2x3x8x16xf32, #tpu.memory_space<vmem>>, vector<1x1x8x16xf32>
    %566 = vector.shape_cast %565 : vector<1x1x8x16xf32> to vector<8x16xf32>
    %567 = vector.shape_cast %564 : vector<8x16xf32> to vector<1x1x8x16xf32>
    tpu.vector_store %arg5[%c1_233, %c1_234, %c0_235, %c0_236], %567 {strides = array<i32>} : memref<2x3x8x16xf32, #tpu.memory_space<vmem>>, vector<1x1x8x16xf32>,
    %568 = arith.negf %564 : vector<8x16xf32>
    %569 = math.exp %568 : vector<8x16xf32>
    %cst_237 = arith.constant 1.000000e+00 : f32
    %570 = vector.broadcast %cst_237 : f32 to vector<8x16xf32>
    %571 = arith.addf %570, %569 : vector<8x16xf32>
    %572 = arith.divf %570, %571 : vector<8x16xf32>
    %cst_238 = arith.constant 2.000000e+00 : f32
    %573 = vector.broadcast %cst_238 : f32 to vector<8x16xf32>
    %574 = arith.mulf %572, %573 : vector<8x16xf32>
    %cst_239 = arith.constant 5.000000e-01 : f32
    %575 = vector.broadcast %cst_239 : f32 to vector<8x16xf32>
    %576 = arith.subf %574, %575 : vector<8x16xf32>
    %577 = arith.addf %576, %456 : vector<8x16xf32>
    %cst_240 = arith.constant 3.200000e+01 : f32
    %578 = vector.broadcast %cst_240 : f32 to vector<8x16xf32>
    %579 = arith.mulf %577, %578 : vector<8x16xf32>
    %cst_241 = arith.constant 2.000000e+00 : f32
    %580 = vector.broadcast %cst_241 : f32 to vector<8x16xf32>
    %581 = arith.mulf %572, %580 : vector<8x16xf32>
    %582 = arith.mulf %581, %581 : vector<8x16xf32>
    %583 = arith.mulf %582, %530 : vector<8x16xf32>
    %c2_i32_242 = arith.constant 2 : i32
    %584 = vector.broadcast %c2_i32_242 : i32 to vector<8x16xi32>
    %585 = arith.cmpi slt, %449, %584 : vector<8x16xi32>
    %c4_i32_243 = arith.constant 4 : i32
    %586 = vector.broadcast %c4_i32_243 : i32 to vector<8x16xi32>
    %587 = arith.cmpi slt, %449, %586 : vector<8x16xi32>
    %588 = arith.select %587, %583, %572 : vector<8x16xi1>, vector<8x16xf32>
    %589 = arith.select %585, %579, %588 : vector<8x16xi1>, vector<8x16xf32>
    %c1_244 = arith.constant 1 : index
    %c0_245 = arith.constant 0 : index
    %c976_246 = arith.constant 976 : index
    %590 = vector.load %arg6[%c1_244, %c0_245, %c976_246] : memref<2x8x1008xf32, #tpu.memory_space<vmem>>, vector<1x8x16xf32>
    %591 = vector.shape_cast %590 : vector<1x8x16xf32> to vector<8x16xf32>
    %592 = vector.shape_cast %589 : vector<8x16xf32> to vector<1x8x16xf32>
    tpu.vector_store %arg6[%c1_244, %c0_245, %c976_246], %592 {strides = array<i32>} : memref<2x8x1008xf32, #tpu.memory_space<vmem>>, vector<1x8x16xf32>,
    %593 = vector.extract_strided_slice %3 {offsets = [16, 2], sizes = [8, 1], strides = [1, 1]} : vector<24x3xf32> to vector<8x1xf32>
    %c2_i32_247 = arith.constant 2 : i32
    %594 = vector.broadcast %c2_i32_247 : i32 to vector<8x16xi32>
    %595 = arith.cmpi eq, %449, %594 : vector<8x16xi32>
    %cst_248 = arith.constant 3.730000e+02 : f32
    %cst_249 = arith.constant 3.260000e+02 : f32
    %596 = vector.broadcast %cst_248 : f32 to vector<8x16xf32>
    %597 = vector.broadcast %cst_249 : f32 to vector<8x16xf32>
    %598 = arith.select %595, %596, %597 : vector<8x16xi1>, vector<8x16xf32>
    %599 = vector.extract_strided_slice %2 {offsets = [16, 640], sizes = [8, 16], strides = [1, 1]} : vector<24x672xf32> to vector<8x16xf32>
    %600 = vector.broadcast %593 : vector<8x1xf32> to vector<8x16xf32>
    %601 = arith.addf %599, %600 : vector<8x16xf32>
    %c0_250 = arith.constant 0 : index
    %c2_251 = arith.constant 2 : index
    %c0_252 = arith.constant 0 : index
    %c0_253 = arith.constant 0 : index
    %602 = vector.load %arg5[%c0_250, %c2_251, %c0_252, %c0_253] : memref<2x3x8x16xf32, #tpu.memory_space<vmem>>, vector<1x1x8x16xf32>
    %603 = vector.shape_cast %602 : vector<1x1x8x16xf32> to vector<8x16xf32>
    %604 = vector.shape_cast %601 : vector<8x16xf32> to vector<1x1x8x16xf32>
    tpu.vector_store %arg5[%c0_250, %c2_251, %c0_252, %c0_253], %604 {strides = array<i32>} : memref<2x3x8x16xf32, #tpu.memory_space<vmem>>, vector<1x1x8x16xf32>,
    %605 = arith.negf %601 : vector<8x16xf32>
    %606 = math.exp %605 : vector<8x16xf32>
    %cst_254 = arith.constant 1.000000e+00 : f32
    %607 = vector.broadcast %cst_254 : f32 to vector<8x16xf32>
    %608 = arith.addf %607, %606 : vector<8x16xf32>
    %609 = arith.divf %607, %608 : vector<8x16xf32>
    %cst_255 = arith.constant 2.000000e+00 : f32
    %610 = vector.broadcast %cst_255 : f32 to vector<8x16xf32>
    %611 = arith.mulf %609, %610 : vector<8x16xf32>
    %cst_256 = arith.constant 5.000000e-01 : f32
    %612 = vector.broadcast %cst_256 : f32 to vector<8x16xf32>
    %613 = arith.subf %611, %612 : vector<8x16xf32>
    %614 = arith.addf %613, %456 : vector<8x16xf32>
    %cst_257 = arith.constant 3.200000e+01 : f32
    %615 = vector.broadcast %cst_257 : f32 to vector<8x16xf32>
    %616 = arith.mulf %614, %615 : vector<8x16xf32>
    %cst_258 = arith.constant 2.000000e+00 : f32
    %617 = vector.broadcast %cst_258 : f32 to vector<8x16xf32>
    %618 = arith.mulf %609, %617 : vector<8x16xf32>
    %619 = arith.mulf %618, %618 : vector<8x16xf32>
    %620 = arith.mulf %619, %598 : vector<8x16xf32>
    %c2_i32_259 = arith.constant 2 : i32
    %621 = vector.broadcast %c2_i32_259 : i32 to vector<8x16xi32>
    %622 = arith.cmpi slt, %449, %621 : vector<8x16xi32>
    %c4_i32_260 = arith.constant 4 : i32
    %623 = vector.broadcast %c4_i32_260 : i32 to vector<8x16xi32>
    %624 = arith.cmpi slt, %449, %623 : vector<8x16xi32>
    %625 = arith.select %624, %620, %609 : vector<8x16xi1>, vector<8x16xf32>
    %626 = arith.select %622, %616, %625 : vector<8x16xi1>, vector<8x16xf32>
    %c0_261 = arith.constant 0 : index
    %c0_262 = arith.constant 0 : index
    %c992 = arith.constant 992 : index
    %627 = vector.load %arg6[%c0_261, %c0_262, %c992] : memref<2x8x1008xf32, #tpu.memory_space<vmem>>, vector<1x8x16xf32>
    %628 = vector.shape_cast %627 : vector<1x8x16xf32> to vector<8x16xf32>
    %629 = vector.shape_cast %626 : vector<8x16xf32> to vector<1x8x16xf32>
    tpu.vector_store %arg6[%c0_261, %c0_262, %c992], %629 {strides = array<i32>} : memref<2x8x1008xf32, #tpu.memory_space<vmem>>, vector<1x8x16xf32>,
    %630 = vector.extract_strided_slice %2 {offsets = [16, 656], sizes = [8, 16], strides = [1, 1]} : vector<24x672xf32> to vector<8x16xf32>
    %631 = vector.broadcast %593 : vector<8x1xf32> to vector<8x16xf32>
    %632 = arith.addf %630, %631 : vector<8x16xf32>
    %c1_263 = arith.constant 1 : index
    %c2_264 = arith.constant 2 : index
    %c0_265 = arith.constant 0 : index
    %c0_266 = arith.constant 0 : index
    %633 = vector.load %arg5[%c1_263, %c2_264, %c0_265, %c0_266] : memref<2x3x8x16xf32, #tpu.memory_space<vmem>>, vector<1x1x8x16xf32>
    %634 = vector.shape_cast %633 : vector<1x1x8x16xf32> to vector<8x16xf32>
    %635 = vector.shape_cast %632 : vector<8x16xf32> to vector<1x1x8x16xf32>
    tpu.vector_store %arg5[%c1_263, %c2_264, %c0_265, %c0_266], %635 {strides = array<i32>} : memref<2x3x8x16xf32, #tpu.memory_space<vmem>>, vector<1x1x8x16xf32>,
    %636 = arith.negf %632 : vector<8x16xf32>
    %637 = math.exp %636 : vector<8x16xf32>
    %cst_267 = arith.constant 1.000000e+00 : f32
    %638 = vector.broadcast %cst_267 : f32 to vector<8x16xf32>
    %639 = arith.addf %638, %637 : vector<8x16xf32>
    %640 = arith.divf %638, %639 : vector<8x16xf32>
    %cst_268 = arith.constant 2.000000e+00 : f32
    %641 = vector.broadcast %cst_268 : f32 to vector<8x16xf32>
    %642 = arith.mulf %640, %641 : vector<8x16xf32>
    %cst_269 = arith.constant 5.000000e-01 : f32
    %643 = vector.broadcast %cst_269 : f32 to vector<8x16xf32>
    %644 = arith.subf %642, %643 : vector<8x16xf32>
    %645 = arith.addf %644, %456 : vector<8x16xf32>
    %cst_270 = arith.constant 3.200000e+01 : f32
    %646 = vector.broadcast %cst_270 : f32 to vector<8x16xf32>
    %647 = arith.mulf %645, %646 : vector<8x16xf32>
    %cst_271 = arith.constant 2.000000e+00 : f32
    %648 = vector.broadcast %cst_271 : f32 to vector<8x16xf32>
    %649 = arith.mulf %640, %648 : vector<8x16xf32>
    %650 = arith.mulf %649, %649 : vector<8x16xf32>
    %651 = arith.mulf %650, %598 : vector<8x16xf32>
    %c2_i32_272 = arith.constant 2 : i32
    %652 = vector.broadcast %c2_i32_272 : i32 to vector<8x16xi32>
    %653 = arith.cmpi slt, %449, %652 : vector<8x16xi32>
    %c4_i32_273 = arith.constant 4 : i32
    %654 = vector.broadcast %c4_i32_273 : i32 to vector<8x16xi32>
    %655 = arith.cmpi slt, %449, %654 : vector<8x16xi32>
    %656 = arith.select %655, %651, %640 : vector<8x16xi1>, vector<8x16xf32>
    %657 = arith.select %653, %647, %656 : vector<8x16xi1>, vector<8x16xf32>
    %c1_274 = arith.constant 1 : index
    %c0_275 = arith.constant 0 : index
    %c992_276 = arith.constant 992 : index
    %658 = vector.load %arg6[%c1_274, %c0_275, %c992_276] : memref<2x8x1008xf32, #tpu.memory_space<vmem>>, vector<1x8x16xf32>
    %659 = vector.shape_cast %658 : vector<1x8x16xf32> to vector<8x16xf32>
    %660 = vector.shape_cast %657 : vector<8x16xf32> to vector<1x8x16xf32>
    tpu.vector_store %arg6[%c1_274, %c0_275, %c992_276], %660 {strides = array<i32>} : memref<2x8x1008xf32, #tpu.memory_space<vmem>>, vector<1x8x16xf32>,
    return
  }
}

</mosaic_0001>

<llo_original>
// kernel: tpu_custom_call.1
$region0: #{tpu_custom_call.1}
  #allocation0 [shape = 'u32[]', space=smem, size = 0x4, offset = 0x4, fixed_abs, tag = 'smem constant byte address 0x4 - core index']
  #allocation1 [shape = 'u32[144,128]{1,0:T(1,128)}', space=vmem, size = 0x12000, scoped, tag = 'internal scratch']
  %s0 = inlined_call_operand.hbm [shape: f32[112,672], index: 0, kind: input, shape index: {}]
  %s1 = inlined_call_operand.vmem [shape: f32[24,112], index: 1, kind: input, shape index: {}]
  %s2 = inlined_call_operand.vmem [shape: f32[24,3], index: 2, kind: input, shape index: {}]
  %s3 = inlined_call_operand.hbm [shape: f32[2,3,8,256], index: 3, kind: output, shape index: {0}]
  %s4 = inlined_call_operand.hbm [shape: f32[2,3,8,64], index: 4, kind: output, shape index: {1}]
  %s5 = inlined_call_operand.hbm [shape: f32[2,3,8,16], index: 5, kind: output, shape index: {2}]
  %s6 = inlined_call_operand.hbm [shape: f32[2,8,1008], index: 6, kind: output, shape index: {3}]
  %7 = xla_tuple %s3, %s4, %s5, %s6
  %s8 = sld [smem:[#allocation0]]
  $region50: #{tpu_custom_call.1} parent=0
    _
  %s10 = ssub.s32 1, %s8
  %s11 = scalar_select 0, %s10, %s8
  $region1: #{tpu_custom_call.1} parent=0
    #allocation2 [shape = 'u8[344064]{0}', space=vmem, size = 0x54000, scoped, tag = 'input window, operand 0, single buffered']
    #allocation3 [shape = 's32[1]{0}', space=sflag, size = 0x4, scoped, tag = 'scoped memory for tpu_custom_call.1']
    #allocation4 [shape = 's32[1]{0}', space=sflag, size = 0x4, scoped, tag = 'scoped memory for tpu_custom_call.1']
    #allocation5 [shape = 'u8[49152]{0}', space=vmem, size = 0xc000, scoped, tag = 'output window, operand 0, single buffered']
    #allocation6 [shape = 'u8[24576]{0}', space=vmem, size = 0x6000, scoped, tag = 'output window, operand 1, single buffered']
    #allocation7 [shape = 's32[1]{0}', space=sflag, size = 0x4, scoped, tag = 'scoped memory for tpu_custom_call.1']
    #allocation8 [shape = 'u8[24576]{0}', space=vmem, size = 0x6000, scoped, tag = 'output window, operand 2, single buffered']
    #allocation9 [shape = 'u8[65536]{0}', space=vmem, size = 0x10000, scoped, tag = 'output window, operand 3, single buffered']
    #allocation10 [shape = 's32[1]{0}', space=sflag, size = 0x4, scoped, tag = 'scoped memory for tpu_custom_call.1']
    %12 = vsyncpa [#allocation3], 0
    %13 = vsyncpa [#allocation4], 0
    %14 = vsyncpa [#allocation7], 0
    %15 = vsyncpa [#allocation10], 0
    // Predicated region
    $region2: #{tpu_custom_call.1} parent=1 // pred_check
      _
    $region3: #{tpu_custom_call.1} parent=1 // pred_check_branch
      %17 = sbr.rel (0) target = $region5
    $region4: #{tpu_custom_call.1} parent=1 // pred_region
      %s19 = ssub.s32 10752, 10752
      %20 = vsyncadd [#allocation3], %s19
      %s21 = sshll.u32 [#allocation2], 4
      %s22 = int_to_ptr.vmem [resolvable:$true] %s21
      %27 = dma.hbm_to_vmem [thread:$0]  %s0, 10752, %s22, [#allocation3], 768, 768, 48
    $region5: #{tpu_custom_call.1} parent=1 // pred_fallthru
      _
    // Predicated region
    $region6: #{tpu_custom_call.1} parent=1 // pred_check
      _
    $region7: #{tpu_custom_call.1} parent=1 // pred_check_branch
      %29 = sbr.rel (0) target = $region9
    $region8: #{tpu_custom_call.1} parent=1 // pred_region
      _
    $region9: #{tpu_custom_call.1} parent=1 // pred_fallthru
      _
    // Predicated region
    $region10: #{tpu_custom_call.1} parent=1 // pred_check
      _
    $region11: #{tpu_custom_call.1} parent=1 // pred_check_branch
      %31 = sbr.rel (0) target = $region13
    $region12: #{tpu_custom_call.1} parent=1 // pred_region
      _
    $region13: #{tpu_custom_call.1} parent=1 // pred_fallthru
      _
    // Predicated region
    $region14: #{tpu_custom_call.1} parent=1 // pred_check
      _
    $region15: #{tpu_custom_call.1} parent=1 // pred_check_branch
      %33 = sbr.rel (0) target = $region17
    $region16: #{tpu_custom_call.1} parent=1 // pred_region
      %34 = dma.done [#allocation3], 10752
    $region17: #{tpu_custom_call.1} parent=1 // pred_fallthru
      _
    %v35 = vld [vmem:[%s1] sm:$0xff]
    %v36 = vld [vmem:[%s1 + $0x8] sm:$0xff]
    %v37 = vld [vmem:[%s1 + $0x10] sm:$0xff]
    %v38 = vld [vmem:[#allocation2] sm:$0xff]
    %v39 = vld [vmem:[#allocation2 + $0x8] sm:$0xff]
    %v40 = vld [vmem:[#allocation2 + $0x10] sm:$0xff]
    %v41 = vld [vmem:[#allocation2 + $0x18] sm:$0xff]
    %v42 = vld [vmem:[#allocation2 + $0x20] sm:$0xff]
    %v43 = vld [vmem:[#allocation2 + $0x28] sm:$0xff]
    %v44 = vld [vmem:[#allocation2 + $0x30] sm:$0xff]
    %v45 = vld [vmem:[#allocation2 + $0x38] sm:$0xff]
    %v46 = vld [vmem:[#allocation2 + $0x40] sm:$0xff]
    %v47 = vld [vmem:[#allocation2 + $0x48] sm:$0xff]
    %v48 = vld [vmem:[#allocation2 + $0x50] sm:$0xff]
    %v49 = vld [vmem:[#allocation2 + $0x58] sm:$0xff]
    %v50 = vld [vmem:[#allocation2 + $0x60] sm:$0xff]
    %v51 = vld [vmem:[#allocation2 + $0x68] sm:$0xff]
    %v52 = vld [vmem:[#allocation2 + $0x70] sm:$0xff]
    %v53 = vld [vmem:[#allocation2 + $0x78] sm:$0xff]
    %v54 = vld [vmem:[#allocation2 + $0x80] sm:$0xff]
    %v55 = vld [vmem:[#allocation2 + $0x88] sm:$0xff]
    %v56 = vld [vmem:[#allocation2 + $0x90] sm:$0xff]
    %v57 = vld [vmem:[#allocation2 + $0x98] sm:$0xff]
    %v58 = vld [vmem:[#allocation2 + $0xa0] sm:$0xff]
    %v59 = vld [vmem:[#allocation2 + $0xa8] sm:$0xff]
    %v60 = vld [vmem:[#allocation2 + $0xb0] sm:$0xff]
    %v61 = vld [vmem:[#allocation2 + $0xb8] sm:$0xff]
    %v62 = vld [vmem:[#allocation2 + $0xc0] sm:$0xff]
    %v63 = vld [vmem:[#allocation2 + $0xc8] sm:$0xff]
    %v64 = vld [vmem:[#allocation2 + $0xd0] sm:$0xff]
    %v65 = vld [vmem:[#allocation2 + $0xd8] sm:$0xff]
    %v66 = vld [vmem:[#allocation2 + $0xe0] sm:$0xff]
    %v67 = vld [vmem:[#allocation2 + $0xe8] sm:$0xff]
    %v68 = vld [vmem:[#allocation2 + $0xf0] sm:$0xff]
    %v69 = vld [vmem:[#allocation2 + $0xf8] sm:$0xff]
    %v70 = vld [vmem:[#allocation2 + $0x100] sm:$0xff]
    %v71 = vld [vmem:[#allocation2 + $0x108] sm:$0xff]
    %v72 = vld [vmem:[#allocation2 + $0x110] sm:$0xff]
    %v73 = vld [vmem:[#allocation2 + $0x118] sm:$0xff]
    %v74 = vld [vmem:[#allocation2 + $0x120] sm:$0xff]
    %v75 = vld [vmem:[#allocation2 + $0x128] sm:$0xff]
    %v76 = vld [vmem:[#allocation2 + $0x130] sm:$0xff]
    %v77 = vld [vmem:[#allocation2 + $0x138] sm:$0xff]
    %v78 = vld [vmem:[#allocation2 + $0x140] sm:$0xff]
    %v79 = vld [vmem:[#allocation2 + $0x148] sm:$0xff]
    %v80 = vld [vmem:[#allocation2 + $0x150] sm:$0xff]
    %v81 = vld [vmem:[#allocation2 + $0x158] sm:$0xff]
    %v82 = vld [vmem:[#allocation2 + $0x160] sm:$0xff]
    %v83 = vld [vmem:[#allocation2 + $0x168] sm:$0xff]
    %v84 = vld [vmem:[#allocation2 + $0x170] sm:$0xff]
    %v85 = vld [vmem:[#allocation2 + $0x178] sm:$0xff]
    %v86 = vld [vmem:[#allocation2 + $0x180] sm:$0xff]
    %v87 = vld [vmem:[#allocation2 + $0x188] sm:$0xff]
    %v88 = vld [vmem:[#allocation2 + $0x190] sm:$0xff]
    %v89 = vld [vmem:[#allocation2 + $0x198] sm:$0xff]
    %v90 = vld [vmem:[#allocation2 + $0x1a0] sm:$0xff]
    %v91 = vld [vmem:[#allocation2 + $0x1a8] sm:$0xff]
    %v92 = vld [vmem:[#allocation2 + $0x1b0] sm:$0xff]
    %v93 = vld [vmem:[#allocation2 + $0x1b8] sm:$0xff]
    %v94 = vld [vmem:[#allocation2 + $0x1c0] sm:$0xff]
    %v95 = vld [vmem:[#allocation2 + $0x1c8] sm:$0xff]
    %v96 = vld [vmem:[#allocation2 + $0x1d0] sm:$0xff]
    %v97 = vld [vmem:[#allocation2 + $0x1d8] sm:$0xff]
    %v98 = vld [vmem:[#allocation2 + $0x1e0] sm:$0xff]
    %v99 = vld [vmem:[#allocation2 + $0x1e8] sm:$0xff]
    %v100 = vld [vmem:[#allocation2 + $0x1f0] sm:$0xff]
    %v101 = vld [vmem:[#allocation2 + $0x1f8] sm:$0xff]
    %v102 = vld [vmem:[#allocation2 + $0x200] sm:$0xff]
    %v103 = vld [vmem:[#allocation2 + $0x208] sm:$0xff]
    %v104 = vld [vmem:[#allocation2 + $0x210] sm:$0xff]
    %v105 = vld [vmem:[#allocation2 + $0x218] sm:$0xff]
    %v106 = vld [vmem:[#allocation2 + $0x220] sm:$0xff]
    %v107 = vld [vmem:[#allocation2 + $0x228] sm:$0xff]
    %v108 = vld [vmem:[#allocation2 + $0x230] sm:$0xff]
    %v109 = vld [vmem:[#allocation2 + $0x238] sm:$0xff]
    %v110 = vld [vmem:[#allocation2 + $0x240] sm:$0xff]
    %v111 = vld [vmem:[#allocation2 + $0x248] sm:$0xff]
    %v112 = vld [vmem:[#allocation2 + $0x250] sm:$0xff]
    %v113 = vld [vmem:[#allocation2 + $0x258] sm:$0xff]
    %v114 = vld [vmem:[#allocation2 + $0x260] sm:$0xff]
    %v115 = vld [vmem:[#allocation2 + $0x268] sm:$0xff]
    %v116 = vld [vmem:[#allocation2 + $0x270] sm:$0xff]
    %v117 = vld [vmem:[#allocation2 + $0x278] sm:$0xff]
    %v118 = vld [vmem:[#allocation2 + $0x280] sm:$0xff]
    %v119 = vld [vmem:[#allocation2 + $0x288] sm:$0xff]
    %v120 = vld [vmem:[#allocation2 + $0x290] sm:$0xff]
    %v121 = vld [vmem:[#allocation2 + $0x298] sm:$0xff]
    %vm122 = vcmask 916480
    %v124 = vsel %vm122, %v35, 0
    %v127 = vsel %vm122, %v36, 0
    %v130 = vsel %vm122, %v37, 0
    %132 = vmatprep.subr.mxu0 %v39
    %133 = vmatpush1.msra.mxu0 %v38
    %134 = vmatprep.subr.mxu0 %v45
    %135 = vmatpush1.msra.mxu0 %v44
    %136 = vmatprep.subr.mxu0 %v51
    %137 = vmatpush1.msra.mxu0 %v50
    %138 = vmatprep.subr.mxu0 %v57
    %139 = vmatpush1.msra.mxu0 %v56
    %140 = vmatprep.subr.mxu0 %v63
    %141 = vmatpush1.msra.mxu0 %v62
    %142 = vmatprep.subr.mxu0 %v69
    %143 = vmatpush1.msra.mxu0 %v68
    %144 = vmatprep.subr.mxu0 %v75
    %145 = vmatpush1.msra.mxu0 %v74
    %146 = vmatprep.subr.mxu0 %v81
    %147 = vmatpush1.msra.mxu0 %v80
    %148 = vmatprep.subr.mxu0 %v87
    %149 = vmatpush1.msra.mxu0 %v86
    %150 = vmatprep.subr.mxu0 %v93
    %151 = vmatpush1.msra.mxu0 %v92
    %152 = vmatprep.subr.mxu0 %v99
    %153 = vmatpush1.msra.mxu0 %v98
    %154 = vmatprep.subr.mxu0 %v105
    %155 = vmatpush1.msra.mxu0 %v104
    %156 = vmatprep.subr.mxu0 %v111
    %157 = vmatpush1.msra.mxu0 %v110
    %158 = vmatprep.subr.mxu0 %v117
    %159 = vmatpush1.msra.mxu0 %v116
    %160 = vmatprep.subr.mxu0 0.0
    %161 = vmatpush1.msra.mxu0 0.0
    %162 = vmatprep.subr.mxu0 0.0
    %163 = vmatpush1.msra.mxu0 0.0
    %164 = vmatprep.subr.mxu0 0.0
    %165 = vmatpush1.msra.mxu0 0.0
    %166 = vmatprep.subr.mxu0 0.0
    %167 = vmatpush1.msra.mxu0 0.0
    %168 = vmatprep.subr.mxu0 0.0
    %169 = vmatpush1.msra.mxu0 0.0
    %170 = vmatprep.subr.mxu0 0.0
    %171 = vmatpush1.msra.mxu0 0.0
    %172 = vmatprep.subr.mxu0 0.0
    %173 = vmatpush1.msra.mxu0 0.0
    %174 = vmatprep.subr.mxu0 0.0
    %175 = vmatpush1.msra.mxu0 0.0
    %176 = vmatprep.subr.mxu0 0.0
    %177 = vmatpush1.msra.mxu0 0.0
    %178 = vmatprep.subr.mxu0 0.0
    %179 = vmatpush1.msra.mxu0 0.0
    %180 = vmatprep.subr.mxu0 0.0
    %181 = vmatpush1.msra.mxu0 0.0
    %182 = vmatprep.subr.mxu0 0.0
    %183 = vmatpush1.msra.mxu0 0.0
    %184 = vmatprep.subr.mxu0 0.0
    %185 = vmatpush1.msra.mxu0 0.0
    %186 = vmatprep.subr.mxu0 0.0
    %187 = vmatpush1.msra.mxu0 0.0
    %188 = vmatprep.subr.mxu0 0.0
    %189 = vmatpush1.msra.mxu0 0.0
    %190 = vmatprep.subr.mxu0 0.0
    %191 = vmatpush1.msra.mxu0 0.0
    %192 = vmatprep.subr.mxu0 0.0
    %193 = vmatpush1.msra.mxu0 0.0
    %194 = vmatprep.subr.mxu0 0.0
    %195 = vmatpush1.msra.mxu0 0.0
    %196 = vmatprep.mubr.f32.mxu0 0.0
    %197 = vmatmul.mubr.f32.gmra.mrb[0].mxu0 %v124
    %v198 = vpop.f32.mrb[0].mxu0
    %v199 = vadd.f32 0.0, %v198
    %v200 = vpop.f32.mrb[0].mxu0
    %v201 = vadd.f32 0.0, %v200
    %202 = vmatprep.mubr.f32.mxu0 0.0
    %203 = vmatmul.mubr.f32.gmra.mrb[0].mxu0 %v127
    %v204 = vpop.f32.mrb[0].mxu0
    %v205 = vadd.f32 0.0, %v204
    %v206 = vpop.f32.mrb[0].mxu0
    %v207 = vadd.f32 0.0, %v206
    %208 = vmatprep.mubr.f32.mxu0 0.0
    %209 = vmatmul.mubr.f32.gmra.mrb[0].mxu0 %v130
    %v210 = vpop.f32.mrb[0].mxu0
    %v211 = vadd.f32 0.0, %v210
    %v212 = vpop.f32.mrb[0].mxu0
    %v213 = vadd.f32 0.0, %v212
    %214 = vdwg.mxu0
    %215 = vmatprep.subr.mxu0 %v41
    %216 = vmatpush1.msra.mxu0 %v40
    %217 = vmatprep.subr.mxu0 %v47
    %218 = vmatpush1.msra.mxu0 %v46
    %219 = vmatprep.subr.mxu0 %v53
    %220 = vmatpush1.msra.mxu0 %v52
    %221 = vmatprep.subr.mxu0 %v59
    %222 = vmatpush1.msra.mxu0 %v58
    %223 = vmatprep.subr.mxu0 %v65
    %224 = vmatpush1.msra.mxu0 %v64
    %225 = vmatprep.subr.mxu0 %v71
    %226 = vmatpush1.msra.mxu0 %v70
    %227 = vmatprep.subr.mxu0 %v77
    %228 = vmatpush1.msra.mxu0 %v76
    %229 = vmatprep.subr.mxu0 %v83
    %230 = vmatpush1.msra.mxu0 %v82
    %231 = vmatprep.subr.mxu0 %v89
    %232 = vmatpush1.msra.mxu0 %v88
    %233 = vmatprep.subr.mxu0 %v95
    %234 = vmatpush1.msra.mxu0 %v94
    %235 = vmatprep.subr.mxu0 %v101
    %236 = vmatpush1.msra.mxu0 %v100
    %237 = vmatprep.subr.mxu0 %v107
    %238 = vmatpush1.msra.mxu0 %v106
    %239 = vmatprep.subr.mxu0 %v113
    %240 = vmatpush1.msra.mxu0 %v112
    %241 = vmatprep.subr.mxu0 %v119
    %242 = vmatpush1.msra.mxu0 %v118
    %243 = vmatprep.subr.mxu0 0.0
    %244 = vmatpush1.msra.mxu0 0.0
    %245 = vmatprep.subr.mxu0 0.0
    %246 = vmatpush1.msra.mxu0 0.0
    %247 = vmatprep.subr.mxu0 0.0
    %248 = vmatpush1.msra.mxu0 0.0
    %249 = vmatprep.subr.mxu0 0.0
    %250 = vmatpush1.msra.mxu0 0.0
    %251 = vmatprep.subr.mxu0 0.0
    %252 = vmatpush1.msra.mxu0 0.0
    %253 = vmatprep.subr.mxu0 0.0
    %254 = vmatpush1.msra.mxu0 0.0
    %255 = vmatprep.subr.mxu0 0.0
    %256 = vmatpush1.msra.mxu0 0.0
    %257 = vmatprep.subr.mxu0 0.0
    %258 = vmatpush1.msra.mxu0 0.0
    %259 = vmatprep.subr.mxu0 0.0
    %260 = vmatpush1.msra.mxu0 0.0
    %261 = vmatprep.subr.mxu0 0.0
    %262 = vmatpush1.msra.mxu0 0.0
    %263 = vmatprep.subr.mxu0 0.0
    %264 = vmatpush1.msra.mxu0 0.0
    %265 = vmatprep.subr.mxu0 0.0
    %266 = vmatpush1.msra.mxu0 0.0
    %267 = vmatprep.subr.mxu0 0.0
    %268 = vmatpush1.msra.mxu0 0.0
    %269 = vmatprep.subr.mxu0 0.0
    %270 = vmatpush1.msra.mxu0 0.0
    %271 = vmatprep.subr.mxu0 0.0
    %272 = vmatpush1.msra.mxu0 0.0
    %273 = vmatprep.subr.mxu0 0.0
    %274 = vmatpush1.msra.mxu0 0.0
    %275 = vmatprep.subr.mxu0 0.0
    %276 = vmatpush1.msra.mxu0 0.0
    %277 = vmatprep.subr.mxu0 0.0
    %278 = vmatpush1.msra.mxu0 0.0
    %279 = vmatprep.mubr.f32.mxu0 0.0
    %280 = vmatmul.mubr.f32.gmra.mrb[0].mxu0 %v124
    %v281 = vpop.f32.mrb[0].mxu0
    %v282 = vadd.f32 0.0, %v281
    %v283 = vpop.f32.mrb[0].mxu0
    %v284 = vadd.f32 0.0, %v283
    %285 = vmatprep.mubr.f32.mxu0 0.0
    %286 = vmatmul.mubr.f32.gmra.mrb[0].mxu0 %v127
    %v287 = vpop.f32.mrb[0].mxu0
    %v288 = vadd.f32 0.0, %v287
    %v289 = vpop.f32.mrb[0].mxu0
    %v290 = vadd.f32 0.0, %v289
    %291 = vmatprep.mubr.f32.mxu0 0.0
    %292 = vmatmul.mubr.f32.gmra.mrb[0].mxu0 %v130
    %v293 = vpop.f32.mrb[0].mxu0
    %v294 = vadd.f32 0.0, %v293
    %v295 = vpop.f32.mrb[0].mxu0
    %v296 = vadd.f32 0.0, %v295
    %297 = vdwg.mxu0
    %298 = vmatprep.subr.mxu0 %v43
    %299 = vmatpush1.msra.mxu0 %v42
    %300 = vmatprep.subr.mxu0 %v49
    %301 = vmatpush1.msra.mxu0 %v48
    %302 = vmatprep.subr.mxu0 %v55
    %303 = vmatpush1.msra.mxu0 %v54
    %304 = vmatprep.subr.mxu0 %v61
    %305 = vmatpush1.msra.mxu0 %v60
    %306 = vmatprep.subr.mxu0 %v67
    %307 = vmatpush1.msra.mxu0 %v66
    %308 = vmatprep.subr.mxu0 %v73
    %309 = vmatpush1.msra.mxu0 %v72
    %310 = vmatprep.subr.mxu0 %v79
    %311 = vmatpush1.msra.mxu0 %v78
    %312 = vmatprep.subr.mxu0 %v85
    %313 = vmatpush1.msra.mxu0 %v84
    %314 = vmatprep.subr.mxu0 %v91
    %315 = vmatpush1.msra.mxu0 %v90
    %316 = vmatprep.subr.mxu0 %v97
    %317 = vmatpush1.msra.mxu0 %v96
    %318 = vmatprep.subr.mxu0 %v103
    %319 = vmatpush1.msra.mxu0 %v102
    %320 = vmatprep.subr.mxu0 %v109
    %321 = vmatpush1.msra.mxu0 %v108
    %322 = vmatprep.subr.mxu0 %v115
    %323 = vmatpush1.msra.mxu0 %v114
    %324 = vmatprep.subr.mxu0 %v121
    %325 = vmatpush1.msra.mxu0 %v120
    %326 = vmatprep.subr.mxu0 0.0
    %327 = vmatpush1.msra.mxu0 0.0
    %328 = vmatprep.subr.mxu0 0.0
    %329 = vmatpush1.msra.mxu0 0.0
    %330 = vmatprep.subr.mxu0 0.0
    %331 = vmatpush1.msra.mxu0 0.0
    %332 = vmatprep.subr.mxu0 0.0
    %333 = vmatpush1.msra.mxu0 0.0
    %334 = vmatprep.subr.mxu0 0.0
    %335 = vmatpush1.msra.mxu0 0.0
    %336 = vmatprep.subr.mxu0 0.0
    %337 = vmatpush1.msra.mxu0 0.0
    %338 = vmatprep.subr.mxu0 0.0
    %339 = vmatpush1.msra.mxu0 0.0
    %340 = vmatprep.subr.mxu0 0.0
    %341 = vmatpush1.msra.mxu0 0.0
    %342 = vmatprep.subr.mxu0 0.0
    %343 = vmatpush1.msra.mxu0 0.0
    %344 = vmatprep.subr.mxu0 0.0
    %345 = vmatpush1.msra.mxu0 0.0
    %346 = vmatprep.subr.mxu0 0.0
    %347 = vmatpush1.msra.mxu0 0.0
    %348 = vmatprep.subr.mxu0 0.0
    %349 = vmatpush1.msra.mxu0 0.0
    %350 = vmatprep.subr.mxu0 0.0
    %351 = vmatpush1.msra.mxu0 0.0
    %352 = vmatprep.subr.mxu0 0.0
    %353 = vmatpush1.msra.mxu0 0.0
    %354 = vmatprep.subr.mxu0 0.0
    %355 = vmatpush1.msra.mxu0 0.0
    %356 = vmatprep.subr.mxu0 0.0
    %357 = vmatpush1.msra.mxu0 0.0
    %358 = vmatprep.subr.mxu0 0.0
    %359 = vmatpush1.msra.mxu0 0.0
    %360 = vmatprep.subr.mxu0 0.0
    %361 = vmatpush1.msra.mxu0 0.0
    %362 = vmatprep.mubr.f32.mxu0 0.0
    %363 = vmatmul.mubr.f32.gmra.mrb[0].mxu0 %v124
    %v364 = vpop.f32.mrb[0].mxu0
    %v365 = vadd.f32 0.0, %v364
    %v366 = vpop.f32.mrb[0].mxu0
    %v367 = vadd.f32 0.0, %v366
    %368 = vmatprep.mubr.f32.mxu0 0.0
    %369 = vmatmul.mubr.f32.gmra.mrb[0].mxu0 %v127
    %v370 = vpop.f32.mrb[0].mxu0
    %v371 = vadd.f32 0.0, %v370
    %v372 = vpop.f32.mrb[0].mxu0
    %v373 = vadd.f32 0.0, %v372
    %374 = vmatprep.mubr.f32.mxu0 0.0
    %375 = vmatmul.mubr.f32.gmra.mrb[0].mxu0 %v130
    %v376 = vpop.f32.mrb[0].mxu0
    %v377 = vadd.f32 0.0, %v376
    %v378 = vpop.f32.mrb[0].mxu0
    %v379 = vadd.f32 0.0, %v378
    %380 = vdwg.mxu0
    %v381 = vld [vmem:[%s2] sm:$0xff]
    %v382 = vld [vmem:[%s2 + $0x8] sm:$0xff]
    %v383 = vld [vmem:[%s2 + $0x10] sm:$0xff]
    %v384 = vlaneseq
    %v385 = vand.u32 %v384, 127
    %v386 = vadd.s32 %v385, 128
    %v387 = vshra.s32 %v385, 4
    %v388 = vshra.s32 %v386, 4
    %v389 = vcvt.s32.f32 %v387
    %v390 = vcvt.s32.f32 %v388
    %v391 = vand.u32 %v385, 15
    %v392 = vand.u32 %v386, 15
    %v393 = vcvt.s32.f32 %v391
    %v394 = vcvt.s32.f32 %v392
    %v395 = vlaneseq
    %v396 = vshrl.u32 %v395, 7
    %vm397 = vcmp.eq.s32.totalorder %v396, 0
    %v398 = vsel %vm397, %v393, %v389
    %v399 = vsel %vm397, %v394, %v390
    %vm400 = vcmp.eq.s32.totalorder %v396, 2
    %v401 = vsel %vm400, 10.0, 13.0
    %403 = vset.pattern.permute.xlu0 0
    %404 = vperm.xlu0 %403, %v381
    %v405 = vpop.permute.xlu0 %404
    %v407 = vadd.f32 %v199, %v405
    %v408 = vadd.f32 %v201, %v405
    %409 = vst [vmem:[#allocation5] sm:$0xff] %v407
    %410 = vst [vmem:[#allocation5 + $0x8] sm:$0xff] %v408
    %v411 = vxor.u32 %v407, 2147483648
    %v412 = vxor.u32 %v408, 2147483648
    %v413 = vmul.f32 %v411, 1.442695
    %v414 = vpow.pop %v413
    %v415 = vmul.f32 %v412, 1.442695
    %v416 = vpow.pop %v415
    %v417 = vadd.f32 %v414, 1.0
    %v418 = vadd.f32 %v416, 1.0
    %v419 = vrcp.pop %v417
    %v420 = vmul.f32 1.0, %v419
    %v421 = vrcp.pop %v418
    %v422 = vmul.f32 1.0, %v421
    %v423 = vmul.f32 %v420, 2.0
    %v424 = vmul.f32 %v422, 2.0
    %v425 = vsub.f32 %v423, 0.5
    %v426 = vsub.f32 %v424, 0.5
    %v427 = vadd.f32 %v425, %v398
    %v428 = vadd.f32 %v426, %v399
    %v429 = vmul.f32 %v427, 8.0
    %v430 = vmul.f32 %v428, 8.0
    %v431 = vmul.f32 %v423, %v423
    %v432 = vmul.f32 %v424, %v424
    %v433 = vmul.f32 %v431, %v401
    %v434 = vmul.f32 %v432, %v401
    %vm435 = vcmp.lt.s32.totalorder %v396, 2
    %vm436 = vcmp.lt.s32.totalorder %v396, 4
    %v437 = vsel %vm436, %v433, %v420
    %v438 = vsel %vm436, %v434, %v422
    %v439 = vsel %vm435, %v429, %v437
    %v440 = vsel %vm435, %v430, %v438
    %441 = vst [vmem:[#allocation9] sm:$0xff] %v439
    %442 = vst [vmem:[#allocation9 + $0x8] sm:$0xff] %v440
    %v443 = vadd.f32 %v282, %v405
    %v444 = vadd.f32 %v284, %v405
    %s445 = scalar_lea.vmem [#allocation5], 48
    %446 = vst [vmem:[%s445] sm:$0xff] %v443
    %447 = vst [vmem:[%s445 + $0x8] sm:$0xff] %v444
    %v448 = vxor.u32 %v443, 2147483648
    %v449 = vxor.u32 %v444, 2147483648
    %v450 = vmul.f32 %v448, 1.442695
    %v451 = vpow.pop %v450
    %v452 = vmul.f32 %v449, 1.442695
    %v453 = vpow.pop %v452
    %v454 = vadd.f32 %v451, 1.0
    %v455 = vadd.f32 %v453, 1.0
    %v456 = vrcp.pop %v454
    %v457 = vmul.f32 1.0, %v456
    %v458 = vrcp.pop %v455
    %v459 = vmul.f32 1.0, %v458
    %v460 = vmul.f32 %v457, 2.0
    %v461 = vmul.f32 %v459, 2.0
    %v462 = vsub.f32 %v460, 0.5
    %v463 = vsub.f32 %v461, 0.5
    %v464 = vadd.f32 %v462, %v398
    %v465 = vadd.f32 %v463, %v399
    %v466 = vmul.f32 %v464, 8.0
    %v467 = vmul.f32 %v465, 8.0
    %v468 = vmul.f32 %v460, %v460
    %v469 = vmul.f32 %v461, %v461
    %v470 = vmul.f32 %v468, %v401
    %v471 = vmul.f32 %v469, %v401
    %v472 = vsel %vm436, %v470, %v457
    %v473 = vsel %vm436, %v471, %v459
    %v474 = vsel %vm435, %v466, %v472
    %v475 = vsel %vm435, %v467, %v473
    %s476 = scalar_lea.vmem [#allocation9], 64
    %477 = vst [vmem:[%s476] sm:$0xff] %v474
    %478 = vst [vmem:[%s476 + $0x8] sm:$0xff] %v475
    %v479 = vsel %vm400, 16.0, 30.0
    %481 = vset.pattern.permute.xlu0 0
    %482 = vperm.xlu0 %481, %v382
    %v483 = vpop.permute.xlu0 %482
    %v485 = vadd.f32 %v205, %v483
    %v486 = vadd.f32 %v207, %v483
    %s487 = scalar_lea.vmem [#allocation5], 16
    %488 = vst [vmem:[%s487] sm:$0xff] %v485
    %489 = vst [vmem:[%s487 + $0x8] sm:$0xff] %v486
    %v490 = vxor.u32 %v485, 2147483648
    %v491 = vxor.u32 %v486, 2147483648
    %v492 = vmul.f32 %v490, 1.442695
    %v493 = vpow.pop %v492
    %v494 = vmul.f32 %v491, 1.442695
    %v495 = vpow.pop %v494
    %v496 = vadd.f32 %v493, 1.0
    %v497 = vadd.f32 %v495, 1.0
    %v498 = vrcp.pop %v496
    %v499 = vmul.f32 1.0, %v498
    %v500 = vrcp.pop %v497
    %v501 = vmul.f32 1.0, %v500
    %v502 = vmul.f32 %v499, 2.0
    %v503 = vmul.f32 %v501, 2.0
    %v504 = vsub.f32 %v502, 0.5
    %v505 = vsub.f32 %v503, 0.5
    %v506 = vadd.f32 %v504, %v398
    %v507 = vadd.f32 %v505, %v399
    %v508 = vmul.f32 %v506, 8.0
    %v509 = vmul.f32 %v507, 8.0
    %v510 = vmul.f32 %v502, %v502
    %v511 = vmul.f32 %v503, %v503
    %v512 = vmul.f32 %v510, %v479
    %v513 = vmul.f32 %v511, %v479
    %v514 = vsel %vm436, %v512, %v499
    %v515 = vsel %vm436, %v513, %v501
    %v516 = vsel %vm435, %v508, %v514
    %v517 = vsel %vm435, %v509, %v515
    %518 = vst [vmem:[#allocation9 + $0x10] sm:$0xff] %v516
    %519 = vst [vmem:[#allocation9 + $0x18] sm:$0xff] %v517
    %v520 = vadd.f32 %v288, %v483
    %v521 = vadd.f32 %v290, %v483
    %s522 = scalar_lea.vmem [#allocation5], 64
    %523 = vst [vmem:[%s522] sm:$0xff] %v520
    %524 = vst [vmem:[%s522 + $0x8] sm:$0xff] %v521
    %v525 = vxor.u32 %v520, 2147483648
    %v526 = vxor.u32 %v521, 2147483648
    %v527 = vmul.f32 %v525, 1.442695
    %v528 = vpow.pop %v527
    %v529 = vmul.f32 %v526, 1.442695
    %v530 = vpow.pop %v529
    %v531 = vadd.f32 %v528, 1.0
    %v532 = vadd.f32 %v530, 1.0
    %v533 = vrcp.pop %v531
    %v534 = vmul.f32 1.0, %v533
    %v535 = vrcp.pop %v532
    %v536 = vmul.f32 1.0, %v535
    %v537 = vmul.f32 %v534, 2.0
    %v538 = vmul.f32 %v536, 2.0
    %v539 = vsub.f32 %v537, 0.5
    %v540 = vsub.f32 %v538, 0.5
    %v541 = vadd.f32 %v539, %v398
    %v542 = vadd.f32 %v540, %v399
    %v543 = vmul.f32 %v541, 8.0
    %v544 = vmul.f32 %v542, 8.0
    %v545 = vmul.f32 %v537, %v537
    %v546 = vmul.f32 %v538, %v538
    %v547 = vmul.f32 %v545, %v479
    %v548 = vmul.f32 %v546, %v479
    %v549 = vsel %vm436, %v547, %v534
    %v550 = vsel %vm436, %v548, %v536
    %v551 = vsel %vm435, %v543, %v549
    %v552 = vsel %vm435, %v544, %v550
    %553 = vst [vmem:[%s476 + $0x10] sm:$0xff] %v551
    %554 = vst [vmem:[%s476 + $0x18] sm:$0xff] %v552
    %v555 = vsel %vm400, 33.0, 23.0
    %557 = vset.pattern.permute.xlu0 0
    %558 = vperm.xlu0 %557, %v383
    %v559 = vpop.permute.xlu0 %558
    %v561 = vadd.f32 %v211, %v559
    %v562 = vadd.f32 %v213, %v559
    %s563 = scalar_lea.vmem [#allocation5], 32
    %564 = vst [vmem:[%s563] sm:$0xff] %v561
    %565 = vst [vmem:[%s563 + $0x8] sm:$0xff] %v562
    %v566 = vxor.u32 %v561, 2147483648
    %v567 = vxor.u32 %v562, 2147483648
    %v568 = vmul.f32 %v566, 1.442695
    %v569 = vpow.pop %v568
    %v570 = vmul.f32 %v567, 1.442695
    %v571 = vpow.pop %v570
    %v572 = vadd.f32 %v569, 1.0
    %v573 = vadd.f32 %v571, 1.0
    %v574 = vrcp.pop %v572
    %v575 = vmul.f32 1.0, %v574
    %v576 = vrcp.pop %v573
    %v577 = vmul.f32 1.0, %v576
    %v578 = vmul.f32 %v575, 2.0
    %v579 = vmul.f32 %v577, 2.0
    %v580 = vsub.f32 %v578, 0.5
    %v581 = vsub.f32 %v579, 0.5
    %v582 = vadd.f32 %v580, %v398
    %v583 = vadd.f32 %v581, %v399
    %v584 = vmul.f32 %v582, 8.0
    %v585 = vmul.f32 %v583, 8.0
    %v586 = vmul.f32 %v578, %v578
    %v587 = vmul.f32 %v579, %v579
    %v588 = vmul.f32 %v586, %v555
    %v589 = vmul.f32 %v587, %v555
    %v590 = vsel %vm436, %v588, %v575
    %v591 = vsel %vm436, %v589, %v577
    %v592 = vsel %vm435, %v584, %v590
    %v593 = vsel %vm435, %v585, %v591
    %594 = vst [vmem:[#allocation9 + $0x20] sm:$0xff] %v592
    %595 = vst [vmem:[#allocation9 + $0x28] sm:$0xff] %v593
    %v596 = vadd.f32 %v294, %v559
    %v597 = vadd.f32 %v296, %v559
    %s598 = scalar_lea.vmem [#allocation5], 80
    %599 = vst [vmem:[%s598] sm:$0xff] %v596
    %600 = vst [vmem:[%s598 + $0x8] sm:$0xff] %v597
    %v601 = vxor.u32 %v596, 2147483648
    %v602 = vxor.u32 %v597, 2147483648
    %v603 = vmul.f32 %v601, 1.442695
    %v604 = vpow.pop %v603
    %v605 = vmul.f32 %v602, 1.442695
    %v606 = vpow.pop %v605
    %v607 = vadd.f32 %v604, 1.0
    %v608 = vadd.f32 %v606, 1.0
    %v609 = vrcp.pop %v607
    %v610 = vmul.f32 1.0, %v609
    %v611 = vrcp.pop %v608
    %v612 = vmul.f32 1.0, %v611
    %v613 = vmul.f32 %v610, 2.0
    %v614 = vmul.f32 %v612, 2.0
    %v615 = vsub.f32 %v613, 0.5
    %v616 = vsub.f32 %v614, 0.5
    %v617 = vadd.f32 %v615, %v398
    %v618 = vadd.f32 %v616, %v399
    %v619 = vmul.f32 %v617, 8.0
    %v620 = vmul.f32 %v618, 8.0
    %v621 = vmul.f32 %v613, %v613
    %v622 = vmul.f32 %v614, %v614
    %v623 = vmul.f32 %v621, %v555
    %v624 = vmul.f32 %v622, %v555
    %v625 = vsel %vm436, %v623, %v610
    %v626 = vsel %vm436, %v624, %v612
    %v627 = vsel %vm435, %v619, %v625
    %v628 = vsel %vm435, %v620, %v626
    %629 = vst [vmem:[%s476 + $0x20] sm:$0xff] %v627
    %630 = vst [vmem:[%s476 + $0x28] sm:$0xff] %v628
    %v631 = vshra.s32 %v385, 3
    %v632 = vcvt.s32.f32 %v631
    %v633 = vand.u32 %v385, 7
    %v634 = vcvt.s32.f32 %v633
    %v635 = vsel %vm397, %v634, %v632
    %v636 = vsel %vm400, 30.0, 61.0
    %637 = vset.pattern.permute.xlu0 1
    %638 = vperm.xlu0 %637, %v381
    %v639 = vpop.permute.xlu0 %638
    %v641 = vadd.f32 %v365, %v639
    %vm642 = vcmask 523264
    %643 = vst.msk [vmem:[#allocation6] sm:$0xff] %vm642, %v641
    %v644 = vxor.u32 %v641, 2147483648
    %v645 = vmul.f32 %v644, 1.442695
    %v646 = vpow.pop %v645
    %v647 = vadd.f32 %v646, 1.0
    %v648 = vrcp.pop %v647
    %v649 = vmul.f32 1.0, %v648
    %v650 = vmul.f32 %v649, 2.0
    %v651 = vsub.f32 %v650, 0.5
    %v652 = vadd.f32 %v651, %v635
    %v653 = vmul.f32 %v652, 16.0
    %v654 = vmul.f32 %v650, %v650
    %v655 = vmul.f32 %v654, %v636
    %v656 = vsel %vm436, %v655, %v649
    %v657 = vsel %vm435, %v653, %v656
    %658 = vst.msk [vmem:[#allocation9 + $0x30] sm:$0xff] %vm642, %v657
    %660 = vrot.lane.b32.xlu0 %v641, 64
    %v661 = vpop.permute.xlu0 %660
    %s663 = scalar_lea.vmem [#allocation6], 24
    %664 = vst.msk [vmem:[%s663] sm:$0xff] %vm642, %v661
    %666 = vrot.lane.b32.xlu0 %v635, 64
    %v667 = vpop.permute.xlu0 %666
    %v669 = vadd.f32 %v651, %v667
    %v670 = vmul.f32 %v669, 16.0
    %v671 = vsel %vm435, %v670, %v656
    %673 = vrot.lane.b32.xlu0 %v671, 64
    %v674 = vpop.permute.xlu0 %673
    %676 = vst.msk [vmem:[%s476 + $0x30] sm:$0xff] %vm642, %v674
    %v677 = vsel %vm400, 62.0, 45.0
    %678 = vset.pattern.permute.xlu0 1
    %679 = vperm.xlu0 %678, %v382
    %v680 = vpop.permute.xlu0 %679
    %v682 = vadd.f32 %v371, %v680
    %s683 = scalar_lea.vmem [#allocation6], 8
    %684 = vst.msk [vmem:[%s683] sm:$0xff] %vm642, %v682
    %v685 = vxor.u32 %v682, 2147483648
    %v686 = vmul.f32 %v685, 1.442695
    %v687 = vpow.pop %v686
    %v688 = vadd.f32 %v687, 1.0
    %v689 = vrcp.pop %v688
    %v690 = vmul.f32 1.0, %v689
    %v691 = vmul.f32 %v690, 2.0
    %v692 = vsub.f32 %v691, 0.5
    %v693 = vadd.f32 %v692, %v635
    %v694 = vmul.f32 %v693, 16.0
    %v695 = vmul.f32 %v691, %v691
    %v696 = vmul.f32 %v695, %v677
    %v697 = vsel %vm436, %v696, %v690
    %v698 = vsel %vm435, %v694, %v697
    %700 = vrot.lane.b32.xlu0 %v698, 64
    %v701 = vpop.permute.xlu0 %700
    %vm703 = vcmask 1048064
    %704 = vst.msk [vmem:[#allocation9 + $0x30] sm:$0xff] %vm703, %v701
    %706 = vrot.lane.b32.xlu0 %v682, 64
    %v707 = vpop.permute.xlu0 %706
    %s709 = scalar_lea.vmem [#allocation6], 32
    %710 = vst.msk [vmem:[%s709] sm:$0xff] %vm642, %v707
    %v711 = vadd.f32 %v692, %v667
    %v712 = vmul.f32 %v711, 16.0
    %v713 = vsel %vm435, %v712, %v697
    %714 = vst.msk [vmem:[%s476 + $0x30] sm:$0xff] %vm703, %v713
    %v715 = vsel %vm400, 59.0, 119.0
    %716 = vset.pattern.permute.xlu0 1
    %717 = vperm.xlu0 %716, %v383
    %v718 = vpop.permute.xlu0 %717
    %v720 = vadd.f32 %v377, %v718
    %s721 = scalar_lea.vmem [#allocation6], 16
    %722 = vst.msk [vmem:[%s721] sm:$0xff] %vm642, %v720
    %v723 = vxor.u32 %v720, 2147483648
    %v724 = vmul.f32 %v723, 1.442695
    %v725 = vpow.pop %v724
    %v726 = vadd.f32 %v725, 1.0
    %v727 = vrcp.pop %v726
    %v728 = vmul.f32 1.0, %v727
    %v729 = vmul.f32 %v728, 2.0
    %v730 = vsub.f32 %v729, 0.5
    %v731 = vadd.f32 %v730, %v635
    %v732 = vmul.f32 %v731, 16.0
    %v733 = vmul.f32 %v729, %v729
    %v734 = vmul.f32 %v733, %v715
    %v735 = vsel %vm436, %v734, %v728
    %v736 = vsel %vm435, %v732, %v735
    %737 = vst.msk [vmem:[#allocation9 + $0x38] sm:$0xff] %vm642, %v736
    %739 = vrot.lane.b32.xlu0 %v720, 64
    %v740 = vpop.permute.xlu0 %739
    %s742 = scalar_lea.vmem [#allocation6], 40
    %743 = vst.msk [vmem:[%s742] sm:$0xff] %vm642, %v740
    %v744 = vadd.f32 %v730, %v667
    %v745 = vmul.f32 %v744, 16.0
    %v746 = vsel %vm435, %v745, %v735
    %748 = vrot.lane.b32.xlu0 %v746, 64
    %v749 = vpop.permute.xlu0 %748
    %751 = vst.msk [vmem:[%s476 + $0x38] sm:$0xff] %vm642, %v749
    %v752 = vshra.s32 %v385, 2
    %v753 = vcvt.s32.f32 %v752
    %v754 = vand.u32 %v385, 3
    %v755 = vcvt.s32.f32 %v754
    %v756 = vsel %vm397, %v755, %v753
    %v757 = vsel %vm400, 116.0, 90.0
    %758 = vset.pattern.permute.xlu0 2
    %759 = vperm.xlu0 %758, %v381
    %v760 = vpop.permute.xlu0 %759
    %v762 = vadd.f32 %v367, %v760
    %vm763 = vcmask 130048
    %764 = vst.msk [vmem:[#allocation8] sm:$0xff] %vm763, %v762
    %v765 = vxor.u32 %v762, 2147483648
    %v766 = vmul.f32 %v765, 1.442695
    %v767 = vpow.pop %v766
    %v768 = vadd.f32 %v767, 1.0
    %v769 = vrcp.pop %v768
    %v770 = vmul.f32 1.0, %v769
    %v771 = vmul.f32 %v770, 2.0
    %v772 = vsub.f32 %v771, 0.5
    %v773 = vadd.f32 %v772, %v756
    %v774 = vmul.f32 %v773, 32.0
    %v775 = vmul.f32 %v771, %v771
    %v776 = vmul.f32 %v775, %v757
    %v777 = vsel %vm436, %v776, %v770
    %v778 = vsel %vm435, %v774, %v777
    %780 = vrot.lane.b32.xlu0 %v778, 64
    %v781 = vpop.permute.xlu0 %780
    %vm783 = vcmask 654848
    %784 = vst.msk [vmem:[#allocation9 + $0x38] sm:$0xff] %vm783, %v781
    %786 = vrot.lane.b32.xlu0 %v762, 112
    %v787 = vpop.permute.xlu0 %786
    %s789 = scalar_lea.vmem [#allocation8], 24
    %790 = vst.msk [vmem:[%s789] sm:$0xff] %vm763, %v787
    %792 = vrot.lane.b32.xlu0 %v756, 16
    %v793 = vpop.permute.xlu0 %792
    %v795 = vadd.f32 %v772, %v793
    %v796 = vmul.f32 %v795, 32.0
    %v797 = vsel %vm435, %v796, %v777
    %799 = vrot.lane.b32.xlu0 %v797, 48
    %v800 = vpop.permute.xlu0 %799
    %802 = vst.msk [vmem:[%s476 + $0x38] sm:$0xff] %vm783, %v800
    %v803 = vsel %vm400, 156.0, 198.0
    %804 = vset.pattern.permute.xlu0 2
    %805 = vperm.xlu0 %804, %v382
    %v806 = vpop.permute.xlu0 %805
    %v808 = vadd.f32 %v373, %v806
    %s809 = scalar_lea.vmem [#allocation8], 8
    %810 = vst.msk [vmem:[%s809] sm:$0xff] %vm763, %v808
    %v811 = vxor.u32 %v808, 2147483648
    %v812 = vmul.f32 %v811, 1.442695
    %v813 = vpow.pop %v812
    %v814 = vadd.f32 %v813, 1.0
    %v815 = vrcp.pop %v814
    %v816 = vmul.f32 1.0, %v815
    %v817 = vmul.f32 %v816, 2.0
    %v818 = vsub.f32 %v817, 0.5
    %v819 = vadd.f32 %v818, %v756
    %v820 = vmul.f32 %v819, 32.0
    %v821 = vmul.f32 %v817, %v817
    %v822 = vmul.f32 %v821, %v803
    %v823 = vsel %vm436, %v822, %v816
    %v824 = vsel %vm435, %v820, %v823
    %826 = vrot.lane.b32.xlu0 %v824, 80
    %v827 = vpop.permute.xlu0 %826
    %vm829 = vcmask 786048
    %830 = vst.msk [vmem:[#allocation9 + $0x38] sm:$0xff] %vm829, %v827
    %832 = vrot.lane.b32.xlu0 %v808, 112
    %v833 = vpop.permute.xlu0 %832
    %s835 = scalar_lea.vmem [#allocation8], 32
    %836 = vst.msk [vmem:[%s835] sm:$0xff] %vm763, %v833
    %v837 = vadd.f32 %v818, %v793
    %v838 = vmul.f32 %v837, 32.0
    %v839 = vsel %vm435, %v838, %v823
    %841 = vrot.lane.b32.xlu0 %v839, 64
    %v842 = vpop.permute.xlu0 %841
    %844 = vst.msk [vmem:[%s476 + $0x38] sm:$0xff] %vm829, %v842
    %v845 = vsel %vm400, 373.0, 326.0
    %846 = vset.pattern.permute.xlu0 2
    %847 = vperm.xlu0 %846, %v383
    %v848 = vpop.permute.xlu0 %847
    %v850 = vadd.f32 %v379, %v848
    %s851 = scalar_lea.vmem [#allocation8], 16
    %852 = vst.msk [vmem:[%s851] sm:$0xff] %vm763, %v850
    %v853 = vxor.u32 %v850, 2147483648
    %v854 = vmul.f32 %v853, 1.442695
    %v855 = vpow.pop %v854
    %v856 = vadd.f32 %v855, 1.0
    %v857 = vrcp.pop %v856
    %v858 = vmul.f32 1.0, %v857
    %v859 = vmul.f32 %v858, 2.0
    %v860 = vsub.f32 %v859, 0.5
    %v861 = vadd.f32 %v860, %v756
    %v862 = vmul.f32 %v861, 32.0
    %v863 = vmul.f32 %v859, %v859
    %v864 = vmul.f32 %v863, %v845
    %v865 = vsel %vm436, %v864, %v858
    %v866 = vsel %vm435, %v862, %v865
    %868 = vrot.lane.b32.xlu0 %v866, 96
    %v869 = vpop.permute.xlu0 %868
    %vm871 = vcmask 917248
    %872 = vst.msk [vmem:[#allocation9 + $0x38] sm:$0xff] %vm871, %v869
    %874 = vrot.lane.b32.xlu0 %v850, 112
    %v875 = vpop.permute.xlu0 %874
    %s877 = scalar_lea.vmem [#allocation8], 40
    %878 = vst.msk [vmem:[%s877] sm:$0xff] %vm763, %v875
    %v879 = vadd.f32 %v860, %v793
    %v880 = vmul.f32 %v879, 32.0
    %v881 = vsel %vm435, %v880, %v865
    %883 = vrot.lane.b32.xlu0 %v881, 80
    %v884 = vpop.permute.xlu0 %883
    %886 = vst.msk [vmem:[%s476 + $0x38] sm:$0xff] %vm871, %v884
    // Predicated region
    $region18: #{tpu_custom_call.1} parent=1 // pred_check
      _
    $region19: #{tpu_custom_call.1} parent=1 // pred_check_branch
      %888 = sbr.rel (0) target = $region21
    $region20: #{tpu_custom_call.1} parent=1 // pred_region
      %s890 = ssub.s32 1536, 1536
      %891 = vsyncadd [#allocation4], %s890
      %s892 = sshll.u32 [#allocation5], 4
      %s893 = int_to_ptr.vmem [resolvable:$true] %s892
      %898 = dma.vmem_to_hbm [thread:$0]  %s893, 1536, %s3, [#allocation4], 256, 256, 16
    $region21: #{tpu_custom_call.1} parent=1 // pred_fallthru
      _
    // Predicated region
    $region22: #{tpu_custom_call.1} parent=1 // pred_check
      _
    $region23: #{tpu_custom_call.1} parent=1 // pred_check_branch
      %900 = sbr.rel (0) target = $region25
    $region24: #{tpu_custom_call.1} parent=1 // pred_region
      %s902 = ssub.s32 768, 768
      %903 = vsyncadd [#allocation7], %s902
      %s904 = sshll.u32 [#allocation6], 4
      %s905 = int_to_ptr.vmem [resolvable:$true] %s904
      %910 = dma.vmem_to_hbm [thread:$0]  %s905, 768, %s4, [#allocation7], 128, 128, 8
    $region25: #{tpu_custom_call.1} parent=1 // pred_fallthru
      _
    // Predicated region
    $region26: #{tpu_custom_call.1} parent=1 // pred_check
      _
    $region27: #{tpu_custom_call.1} parent=1 // pred_check_branch
      %912 = sbr.rel (0) target = $region29
    $region28: #{tpu_custom_call.1} parent=1 // pred_region
      %s914 = ssub.s32 768, 768
      %915 = vsyncadd [#allocation7], %s914
      %s916 = sshll.u32 [#allocation8], 4
      %s917 = int_to_ptr.vmem [resolvable:$true] %s916
      %922 = dma.vmem_to_hbm [thread:$0]  %s917, 768, %s5, [#allocation7], 128, 128, 8
    $region29: #{tpu_custom_call.1} parent=1 // pred_fallthru
      _
    // Predicated region
    $region30: #{tpu_custom_call.1} parent=1 // pred_check
      _
    $region31: #{tpu_custom_call.1} parent=1 // pred_check_branch
      %924 = sbr.rel (0) target = $region33
    $region32: #{tpu_custom_call.1} parent=1 // pred_region
      %s926 = ssub.s32 2048, 2048
      %927 = vsyncadd [#allocation10], %s926
      %s928 = sshll.u32 [#allocation9], 4
      %s929 = int_to_ptr.vmem [resolvable:$true] %s928
      %934 = dma.vmem_to_hbm [thread:$0]  %s929, 2048, %s6, [#allocation10], 1024, 1024, 64
    $region33: #{tpu_custom_call.1} parent=1 // pred_fallthru
      _
    // Predicated region
    $region34: #{tpu_custom_call.1} parent=1 // pred_check
      _
    $region35: #{tpu_custom_call.1} parent=1 // pred_check_branch
      %936 = sbr.rel (0) target = $region37
    $region36: #{tpu_custom_call.1} parent=1 // pred_region
      %937 = dma.done [#allocation4], 1536
    $region37: #{tpu_custom_call.1} parent=1 // pred_fallthru
      _
    // Predicated region
    $region38: #{tpu_custom_call.1} parent=1 // pred_check
      _
    $region39: #{tpu_custom_call.1} parent=1 // pred_check_branch
      %939 = sbr.rel (0) target = $region41
    $region40: #{tpu_custom_call.1} parent=1 // pred_region
      %940 = dma.done [#allocation7], 768
    $region41: #{tpu_custom_call.1} parent=1 // pred_fallthru
      _
    // Predicated region
    $region42: #{tpu_custom_call.1} parent=1 // pred_check
      _
    $region43: #{tpu_custom_call.1} parent=1 // pred_check_branch
      %942 = sbr.rel (0) target = $region45
    $region44: #{tpu_custom_call.1} parent=1 // pred_region
      %943 = dma.done [#allocation7], 768
    $region45: #{tpu_custom_call.1} parent=1 // pred_fallthru
      _
    // Predicated region
    $region46: #{tpu_custom_call.1} parent=1 // pred_check
      _
    $region47: #{tpu_custom_call.1} parent=1 // pred_check_branch
      %945 = sbr.rel (0) target = $region49
    $region48: #{tpu_custom_call.1} parent=1 // pred_region
      %946 = dma.done [#allocation10], 2048
    $region49: #{tpu_custom_call.1} parent=1 // pred_fallthru
      _
    %947 = vsyncpa [#allocation3], 1
    %948 = vsyncpa [#allocation4], 1
    %949 = vsyncpa [#allocation7], 1
    %950 = vsyncpa [#allocation10], 1

</llo_original>
